<compile_context>
chip_gen: v6e
topology: v6e:2x2x1
jax: 0.10.0
libtpu: 0.0.40
codegen_flags: <defaults>
</compile_context>

<pallas_src>
import functools

import jax
import jax.numpy as jnp
import numpy as np
from jax import lax
from jax.experimental import pallas as pl
from jax.experimental.pallas import tpu as pltpu

# Finite "masked" bias: exp() underflows to exactly 0, no inf/NaN in the online
# softmax recurrence (a literal -inf would poison the running max for masked tiles).
NEG_BIAS = -1e30


def _pick_tile(dim, target, multiple):
    """Largest divisor of `dim` that is <= target and a multiple of `multiple`.

    Divisor tiles sidestep partial-block semantics entirely (important for the
    reduction axes).  Falls back to the full dim, which is always legal w.r.t. the
    (8,128) BlockSpec rule.
    """
    if dim <= target:
        return dim
    start = target - (target % multiple)
    for t in range(start, 0, -multiple):
        if dim % t == 0:
            return t
    # TODO(synk): pad + in-kernel masking for awkward (prime-ish) dims instead of
    # falling back to the full dimension.
    return dim


# ---------------------------------------------------------------------------
# Tiled linear kernel (fused-QKV projection and output projection)
# ---------------------------------------------------------------------------
def _linear_kernel(x_ref, w_ref, b_ref, o_ref, acc_ref):
    k = pl.program_id(2)

    @pl.when(k == 0)
    def _init():
        acc_ref[...] = jnp.zeros(acc_ref.shape, jnp.float32)

    x = x_ref[...]
    w = w_ref[...]
    if x.dtype != w.dtype:          # static (trace-time) decision
        x = x.astype(w.dtype)
    acc_ref[...] += jnp.dot(x, w, preferred_element_type=jnp.float32)

    @pl.when(k == pl.num_programs(2) - 1)
    def _finalize():
        o_ref[...] = (acc_ref[...] + b_ref[...].astype(jnp.float32)).astype(o_ref.dtype)


def pallas_linear(x2d, wt, b2d, *, out_dtype, tile_m=256, tile_n=512, tile_k=512):
    """y = x2d @ wt + b2d with wt already transposed to [E_in, E_out].

    Tiled over (M, N, K) so the weight is never fully resident: per-step VMEM is
    ~2*tm*tk + 2*tk*tn + 2*tm*tn + tm*tn(acc) elements (~3 MiB at the defaults),
    well inside v7x's 32 MiB scoped budget; K/N tiles are multiples of 128 (256+ on
    v6e/v7x MXU) when they divide, else the full dim.
    """
    M, K = x2d.shape
    N = wt.shape[1]
    tm = _pick_tile(M, tile_m, 8)
    tn = _pick_tile(N, tile_n, 128)
    tk = _pick_tile(K, tile_k, 128)
    gm, gn, gk = M // tm, N // tn, K // tk

    xb = x2d.dtype.itemsize
    wb = wt.dtype.itemsize
    ob = jnp.dtype(out_dtype).itemsize
    est = (2 * tm * tk * xb + 2 * tk * tn * wb + 2 * tn * 4
           + 2 * tm * tn * ob + tm * tn * 4)
    vmem_limit = int(min(64 * 2**20, max(32 * 2**20, 2 * est)))

    return pl.pallas_call(
        _linear_kernel,
        out_shape=jax.ShapeDtypeStruct((M, N), out_dtype),
        grid_spec=pltpu.PrefetchScalarGridSpec(
            num_scalar_prefetch=0,
            grid=(gm, gn, gk),
            in_specs=[
                pl.BlockSpec((tm, tk), lambda i, j, k: (i, k)),
                pl.BlockSpec((tk, tn), lambda i, j, k: (k, j)),
                pl.BlockSpec((1, tn), lambda i, j, k: (0, j)),
            ],
            out_specs=pl.BlockSpec((tm, tn), lambda i, j, k: (i, j)),
            scratch_shapes=[pltpu.VMEM((tm, tn), jnp.float32)],
        ),
        compiler_params=pltpu.CompilerParams(
            dimension_semantics=("parallel", "parallel", "arbitrary"),
            vmem_limit_bytes=vmem_limit),
        cost_estimate=pl.CostEstimate(
            flops=2 * M * K * N,
            transcendentals=0,
            bytes_accessed=int(xb * M * K * gn + wb * K * N * gm + ob * M * N)),
    )(x2d, wt, b2d)


# ---------------------------------------------------------------------------
# Flash-tiled sparse attention kernel
# ---------------------------------------------------------------------------
def _flash_attn_kernel(*refs, n_heads, head_dim, masked):
    if masked:
        (flags_ref, q_ref, k_ref, v_ref, bias_ref,
         o_ref, m_ref, l_ref, acc_ref) = refs
    else:
        (q_ref, k_ref, v_ref, o_ref, m_ref, l_ref, acc_ref) = refs
        flags_ref = None
        bias_ref = None

    qi = pl.program_id(1)
    ki = pl.program_id(2)
    n_kv = pl.num_programs(2)

    @pl.when(ki == 0)
    def _init():
        m_ref[...] = jnp.full(m_ref.shape, -jnp.inf, jnp.float32)
        l_ref[...] = jnp.zeros(l_ref.shape, jnp.float32)
        acc_ref[...] = jnp.zeros(acc_ref.shape, jnp.float32)

    def _update():
        q = q_ref[0]            # [tq, E]  (1/sqrt(Dh) scale pre-folded into weights)
        k = k_ref[0]            # [tkv, E]
        v = v_ref[0]            # [tkv, E]
        if masked:
            bias = bias_ref[...].astype(jnp.float32)      # [tq, tkv], 0 / -1e30
        # TODO(synk): process heads in 128-lane groups (head-grouped fused weight
        # layout) to avoid per-head lane-slice relayouts when head_dim < 128.
        for h in range(n_heads):
            lo = h * head_dim
            qh = q[:, lo:lo + head_dim]
            kh = k[:, lo:lo + head_dim]
            vh = v[:, lo:lo + head_dim]
            # QK^T as a direct contraction over the head dim (no materialized k.T).
            s = lax.dot_general(qh, kh, (((1,), (1,)), ((), ())),
                                preferred_element_type=jnp.float32)
            if masked:
                s = s + bias
            m_prev = m_ref[h]
            m_new = jnp.maximum(m_prev, jnp.max(s, axis=-1, keepdims=True))
            alpha = jnp.exp(m_prev - m_new)
            p = jnp.exp(s - m_new)
            l_ref[h] = alpha * l_ref[h] + jnp.sum(p, axis=-1, keepdims=True)
            acc_ref[h] = alpha * acc_ref[h] + jnp.dot(
                p.astype(vh.dtype), vh, preferred_element_type=jnp.float32)
            m_ref[h] = m_new

    if masked:
        # Skip QK^T / softmax / PV for fully-masked (q_tile, kv_tile) pairs.
        # TODO(synk): also skip the K/V/bias DMA by remapping the kv index_map with
        # a scalar-prefetched list of non-empty tiles per q tile.
        pl.when(flags_ref[qi, ki] > 0)(_update)
    else:
        _update()

    @pl.when(ki == n_kv - 1)
    def _finalize():
        outs = []
        for h in range(n_heads):
            # Deferred normalization on [tq, Dh]; exact reciprocal (EUP, off VPU slot).
            inv = pl.reciprocal(l_ref[h], approx=False)
            outs.append(acc_ref[h] * inv)
        out = jnp.concatenate(outs, axis=-1)               # lane-dense [tq, E] store
        # torch.nan_to_num parity / l==0 guard (cannot trigger with the
        # diagonal-filled mask, but cheap and only runs once per (b, q_tile)).
        out = jnp.where(jnp.isnan(out), 0.0, out)
        o_ref[0] = out.astype(o_ref.dtype)


def pallas_flash_attention(qkv, bias, *, n_heads, q_tile=None, kv_tile=None):
    """qkv: [B, S, 3E] fused (Q|K|V) activations.
    bias: [S, S] additive mask bias (0 / NEG_BIAS) or None when the mask is not
    applied (seq_len > max_genes)."""
    B, S, E3 = qkv.shape
    E = E3 // 3
    assert E % n_heads == 0
    Dh = E // n_heads
    masked = bias is not None
    act_dtype = qkv.dtype
    ab = act_dtype.itemsize

    tq = q_tile if q_tile is not None else _pick_tile(S, 256, 8)
    # The kv tile is the lane dim of the bias block -> multiple of 128 (or full S).
    tkv = kv_tile if kv_tile is not None else _pick_tile(S, 256, 128)
    assert S % tq == 0 and S % tkv == 0
    n_q, n_kv = S // tq, S // tkv

    # q/k/v BlockSpecs: consume the fused slab in place when E is lane aligned,
    # otherwise fall back to explicit slices so every block's last dim equals the
    # full array dim (keeps the (8,128) BlockSpec rule satisfied at any E).
    if E % 128 == 0:
        arrays = (qkv, qkv, qkv)
        qcol, kcol, vcol = 0, 1, 2
    else:
        arrays = (lax.slice_in_dim(qkv, 0, E, axis=2),
                  lax.slice_in_dim(qkv, E, 2 * E, axis=2),
                  lax.slice_in_dim(qkv, 2 * E, 3 * E, axis=2))
        qcol = kcol = vcol = 0

    if masked:
        q_map = lambda b, qi, ki, flags: (b, qi, qcol)
        k_map = lambda b, qi, ki, flags: (b, ki, kcol)
        v_map = lambda b, qi, ki, flags: (b, ki, vcol)
        bias_map = lambda b, qi, ki, flags: (qi, ki)
        o_map = lambda b, qi, ki, flags: (b, qi, 0)
    else:
        q_map = lambda b, qi, ki: (b, qi, qcol)
        k_map = lambda b, qi, ki: (b, ki, kcol)
        v_map = lambda b, qi, ki: (b, ki, vcol)
        o_map = lambda b, qi, ki: (b, qi, 0)

    in_specs = [
        pl.BlockSpec((1, tq, E), q_map),
        pl.BlockSpec((1, tkv, E), k_map),
        pl.BlockSpec((1, tkv, E), v_map),
    ]
    call_args = list(arrays)
    if masked:
        in_specs.append(pl.BlockSpec((tq, tkv), bias_map))
        # Per-(q_tile, kv_tile) non-empty flags (scalar-prefetched into SMEM).
        flags = (bias.reshape(n_q, tq, n_kv, tkv) > NEG_BIAS * 0.5).any(axis=(1, 3))
        flags = flags.astype(jnp.int32)
        call_args = [flags] + call_args + [bias.astype(act_dtype)]

    scratch = [
        pltpu.VMEM((n_heads, tq, 1), jnp.float32),    # running max  m
        pltpu.VMEM((n_heads, tq, 1), jnp.float32),    # running sum  l
        pltpu.VMEM((n_heads, tq, Dh), jnp.float32),   # unnormalized accumulator
    ]

    est = (2 * tq * E * ab + 4 * tkv * E * ab + 2 * tq * E * ab
           + (2 * tq * tkv * ab if masked else 0)
           + n_heads * tq * (2 * 128 + max(Dh, 128)) * 4
           + 6 * tq * tkv * 4)
    vmem_limit = int(min(64 * 2**20, max(32 * 2**20, 2 * est)))

    kern = functools.partial(_flash_attn_kernel, n_heads=n_heads, head_dim=Dh,
                             masked=masked)
    bytes_accessed = ab * (B * S * E + 2 * B * n_q * S * E + B * S * E)
    if masked:
        bytes_accessed += ab * B * S * S

    return pl.pallas_call(
        kern,
        out_shape=jax.ShapeDtypeStruct((B, S, E), act_dtype),
        grid_spec=pltpu.PrefetchScalarGridSpec(
            num_scalar_prefetch=1 if masked else 0,
            grid=(B, n_q, n_kv),
            in_specs=in_specs,
            out_specs=pl.BlockSpec((1, tq, E), o_map),
            scratch_shapes=scratch,
        ),
        compiler_params=pltpu.CompilerParams(
            dimension_semantics=("parallel", "parallel", "arbitrary"),
            vmem_limit_bytes=vmem_limit),
        cost_estimate=pl.CostEstimate(
            flops=4 * B * n_heads * S * S * Dh,
            transcendentals=B * n_heads * S * S,
            bytes_accessed=int(bytes_accessed)),
    )(*call_args)


# ---------------------------------------------------------------------------
# Module-equivalent wrappers
# ---------------------------------------------------------------------------
def make_sparse_mask(max_genes, sparsity_ratio=0.1, seed=0):
    """Replicates SparseAttention.create_sparse_mask deterministically (0/1 mask)."""
    mask = np.zeros((max_genes, max_genes), dtype=np.float32)
    window_size = 20
    for i in range(max_genes):
        start = max(0, i - window_size // 2)
        end = min(max_genes, i + window_size // 2 + 1)
        mask[i, start:end] = 1.0
    n_random = int(sparsity_ratio * max_genes * max_genes)
    rng = np.random.RandomState(seed)
    ri = rng.randint(0, max_genes, size=(n_random,))
    rj = rng.randint(0, max_genes, size=(n_random,))
    mask[ri, rj] = 1.0
    np.fill_diagonal(mask, 1.0)
    return jnp.asarray(mask)


def mask_to_bias(mask):
    """0/1 mask -> additive bias (0 where allowed, NEG_BIAS where masked).

    Exact vs. the original `scores * mask` + masked_fill(-inf) because the mask is
    strictly {0,1}: unmasked scores are unchanged and masked probabilities underflow
    to exactly 0 under softmax."""
    return jnp.where(mask == 0.0, NEG_BIAS, 0.0).astype(jnp.float32)


def init_params(key, embed_dim):
    """Deterministic nn.Linear-style init (uniform(-1/sqrt(in), 1/sqrt(in))), torch layout."""
    params = {}
    bound = 1.0 / np.sqrt(embed_dim)
    names = ["query", "key", "value", "out"]
    keys = jax.random.split(key, 2 * len(names))
    for i, name in enumerate(names):
        w = jax.random.uniform(
            keys[2 * i], (embed_dim, embed_dim), jnp.float32, -bound, bound)
        b = jax.random.uniform(
            keys[2 * i + 1], (embed_dim,), jnp.float32, -bound, bound)
        params[name] = (w, b)
    return params


def prepare_params(params, *, n_heads, dtype=jnp.bfloat16):
    """One-time weight preparation (outside jit):
      * pre-transpose and fuse [Wq|Wk|Wv] (no transposes inside the jitted forward),
      * fold the 1/sqrt(Dh) softmax scale into the Q weight/bias (zero runtime cost),
      * cast weights to the compute dtype (bf16 halves weight DMA; biases stay f32)."""
    wq, bq = params["query"]
    wk, bk = params["key"]
    wv, bv = params["value"]
    wo, bo = params["out"]
    E = wq.shape[0]
    scale = 1.0 / float(np.sqrt(E // n_heads))
    return {
        "w_qkv_t": jnp.concatenate(
            [(wq * scale).T, wk.T, wv.T], axis=1).astype(dtype),        # [E, 3E]
        "b_qkv": jnp.concatenate(
            [bq * scale, bk, bv]).reshape(1, -1).astype(jnp.float32),   # [1, 3E]
        "w_out_t": jnp.transpose(wo).astype(dtype),                     # [E, E]
        "b_out": bo.reshape(1, -1).astype(jnp.float32),                 # [1, E]
    }


@functools.partial(jax.jit, static_argnames=("n_heads", "q_tile", "kv_tile"))
def memory_efficient_attention_forward(prepared, mask_bias, x, *, n_heads,
                                       q_tile=None, kv_tile=None):
    B, S, E = x.shape
    act_dtype = prepared["w_qkv_t"].dtype
    x2d = x.reshape(B * S, E)

    # Fused Q/K/V projection: one pass over x, K/N-tiled so it scales to any E.
    qkv = pallas_linear(x2d, prepared["w_qkv_t"], prepared["b_qkv"],
                        out_dtype=act_dtype)                 # [B*S, 3E]
    qkv = qkv.reshape(B, S, 3 * E)

    # SparseAttention applies its mask only when seq_len <= max_genes (static
    # branch); otherwise use the bias-free kernel variant (no zero-bias DMA/adds).
    if S <= mask_bias.shape[0]:
        bias = mask_bias[:S, :S]
    else:
        bias = None

    attn = pallas_flash_attention(qkv, bias, n_heads=n_heads,
                                  q_tile=q_tile, kv_tile=kv_tile)   # [B, S, E]

    out = pallas_linear(attn.reshape(B * S, E),
                        prepared["w_out_t"], prepared["b_out"],
                        out_dtype=jnp.float32)
    # Note: MemoryEfficientAttention defines self.dropout but never applies it in forward().
    return out.reshape(B, S, E)


# ---------------------------------------------------------------------------
# Pure-JAX reference (mirrors the PyTorch forward exactly, f32 throughout)
# ---------------------------------------------------------------------------
def reference_forward(params, mask, x, n_heads):
    B, S, E = x.shape
    Dh = E // n_heads

    def lin(t, w, b):
        return t @ w.T + b

    Q = lin(x, *params["query"]).reshape(B, S, n_heads, Dh).transpose(0, 2, 1, 3)
    K = lin(x, *params["key"]).reshape(B, S, n_heads, Dh).transpose(0, 2, 1, 3)
    V = lin(x, *params["value"]).reshape(B, S, n_heads, Dh).transpose(0, 2, 1, 3)

    scores = jnp.einsum("bhqd,bhkd->bhqk", Q, K) / jnp.sqrt(jnp.float32(Dh))
    if S <= mask.shape[0]:
        m = mask[:S, :S]
        scores = scores * m
        scores = jnp.where(m == 0.0, -jnp.inf, scores)
    p = jax.nn.softmax(scores, axis=-1)
    p = jnp.where(jnp.isnan(p), 0.0, p)
    o = jnp.einsum("bhqk,bhkd->bhqd", p, V)
    o = o.transpose(0, 2, 1, 3).reshape(B, S, E)
    return lin(o, *params["out"])


# ---------------------------------------------------------------------------
if __name__ == "__main__":
    def run_case(*, B, S, E, H, max_genes, sparsity, dtype,
                 q_tile=None, kv_tile=None, rtol=1e-3, atol=1e-3):
        key = jax.random.PRNGKey(0)
        k_params, k_x = jax.random.split(key)
        params = init_params(k_params, E)
        prepared = prepare_params(params, n_heads=H, dtype=dtype)
        mask = make_sparse_mask(max_genes, sparsity_ratio=sparsity, seed=0)
        mask_bias = mask_to_bias(mask)
        x = jax.random.normal(k_x, (B, S, E), dtype=jnp.float32)

        out = memory_efficient_attention_forward(
            prepared, mask_bias, x, n_heads=H, q_tile=q_tile, kv_tile=kv_tile)
        out = jax.block_until_ready(out)

        ref = reference_forward(params, mask, x, H)
        np.testing.assert_allclose(np.asarray(out), np.asarray(ref),
                                   rtol=rtol, atol=atol)

    # 1) Module-scale small shapes, f32 path, sparse mask applied (S <= max_genes).
    run_case(B=2, S=8, E=32, H=4, max_genes=16, sparsity=0.1,
             dtype=jnp.float32, rtol=1e-3, atol=1e-5)

    # 2) Lane-aligned E (fused qkv consumed in place), bf16 activations, multi-tile
    #    flash path where the far off-diagonal (band-only) tiles are fully masked
    #    and skipped via the prefetched flag table.
    run_case(B=1, S=384, E=128, H=2, max_genes=384, sparsity=0.0,
             dtype=jnp.bfloat16, q_tile=128, kv_tile=128, rtol=5e-2, atol=5e-2)

    # 3) seq_len > max_genes -> mask statically skipped -> bias-free kernel variant.
    run_case(B=2, S=24, E=32, H=4, max_genes=16, sparsity=0.1,
             dtype=jnp.bfloat16, rtol=5e-2, atol=5e-2)

    print("KERNEL_OK")
</pallas_src>

<mosaic_0001>
module attributes {stable_mosaic.version = 11 : i64} {
  func.func @_linear_kernel(%arg0: i32, %arg1: i32, %arg2: i32, %arg3: memref<16x32xf32, #tpu.memory_space<vmem>>, %arg4: memref<32x96xf32, #tpu.memory_space<vmem>>, %arg5: memref<1x96xf32, #tpu.memory_space<vmem>>, %arg6: memref<16x96xf32, #tpu.memory_space<vmem>>, %arg7: memref<16x96xf32, #tpu.memory_space<vmem>>) attributes {dimension_semantics = [#tpu.dimension_semantics<parallel>, #tpu.dimension_semantics<parallel>, #tpu.dimension_semantics<arbitrary>], iteration_bounds = array<i64: 1, 1, 1>, scalar_prefetch = 0 : i64, scratch_operands = 1 : i64, tpu.core_type = #tpu.core_type<tc>, window_params = [{transform_indices = @transform_0, window_bounds = array<i64: 16, 32>}, {transform_indices = @transform_1, window_bounds = array<i64: 32, 96>}, {transform_indices = @transform_2, window_bounds = array<i64: 1, 96>}, {transform_indices = @transform_3, window_bounds = array<i64: 16, 96>}]} {
    %c0_i32 = arith.constant 0 : i32
    %0 = arith.cmpi eq, %arg2, %c0_i32 : i32
    %1 = arith.extui %0 : i1 to i32
    %c0_i32_0 = arith.constant 0 : i32
    %2 = arith.cmpi ne, %1, %c0_i32_0 : i32
    scf.if %2 {
      %cst_10 = arith.constant 0.000000e+00 : f32
      %12 = vector.broadcast %cst_10 : f32 to vector<16x96xf32>
      %c0_11 = arith.constant 0 : index
      %c0_12 = arith.constant 0 : index
      %13 = vector.load %arg7[%c0_11, %c0_12] : memref<16x96xf32, #tpu.memory_space<vmem>>, vector<16x96xf32>
      tpu.vector_store %arg7[%c0_11, %c0_12], %12 {strides = array<i32>} : memref<16x96xf32, #tpu.memory_space<vmem>>, vector<16x96xf32>,
    } else {
    }
    %c0 = arith.constant 0 : index
    %c0_1 = arith.constant 0 : index
    %3 = vector.load %arg3[%c0, %c0_1] : memref<16x32xf32, #tpu.memory_space<vmem>>, vector<16x32xf32>
    %c0_2 = arith.constant 0 : index
    %c0_3 = arith.constant 0 : index
    %4 = vector.load %arg4[%c0_2, %c0_3] : memref<32x96xf32, #tpu.memory_space<vmem>>, vector<32x96xf32>
    %c0_4 = arith.constant 0 : index
    %c0_5 = arith.constant 0 : index
    %5 = vector.load %arg7[%c0_4, %c0_5] : memref<16x96xf32, #tpu.memory_space<vmem>>, vector<16x96xf32>
    %cst = arith.constant dense<0.000000e+00> : vector<16x96xf32>
    %6 = tpu.matmul %3, %4, %cst {dimension_numbers = #tpu.dot_dimension_numbers<[1], [0], [0], [1], [0, 0, 1, 1], [], []>} : vector<16x32xf32>, vector<32x96xf32>, vector<16x96xf32> -> vector<16x96xf32>
    %7 = arith.addf %5, %6 : vector<16x96xf32>
    %c0_6 = arith.constant 0 : index
    %c0_7 = arith.constant 0 : index
    %8 = vector.load %arg7[%c0_6, %c0_7] : memref<16x96xf32, #tpu.memory_space<vmem>>, vector<16x96xf32>
    tpu.vector_store %arg7[%c0_6, %c0_7], %7 {strides = array<i32>} : memref<16x96xf32, #tpu.memory_space<vmem>>, vector<16x96xf32>,
    %c0_i32_8 = arith.constant 0 : i32
    %9 = arith.cmpi eq, %arg2, %c0_i32_8 : i32
    %10 = arith.extui %9 : i1 to i32
    %c0_i32_9 = arith.constant 0 : i32
    %11 = arith.cmpi ne, %10, %c0_i32_9 : i32
    scf.if %11 {
      %c0_10 = arith.constant 0 : index
      %c0_11 = arith.constant 0 : index
      %12 = vector.load %arg7[%c0_10, %c0_11] : memref<16x96xf32, #tpu.memory_space<vmem>>, vector<16x96xf32>
      %c0_12 = arith.constant 0 : index
      %c0_13 = arith.constant 0 : index
      %13 = vector.load %arg5[%c0_12, %c0_13] : memref<1x96xf32, #tpu.memory_space<vmem>>, vector<1x96xf32>
      %14 = vector.broadcast %13 : vector<1x96xf32> to vector<16x96xf32>
      %15 = arith.addf %12, %14 : vector<16x96xf32>
      %c0_14 = arith.constant 0 : index
      %c0_15 = arith.constant 0 : index
      %16 = vector.load %arg6[%c0_14, %c0_15] : memref<16x96xf32, #tpu.memory_space<vmem>>, vector<16x96xf32>
      tpu.vector_store %arg6[%c0_14, %c0_15], %15 {strides = array<i32>} : memref<16x96xf32, #tpu.memory_space<vmem>>, vector<16x96xf32>,
    } else {
    }
    return
  }
  func.func @transform_0(%arg0: i32, %arg1: i32, %arg2: i32) -> (i32, i32) {
    %c0_i32 = arith.constant 0 : i32
    return %arg0, %arg2 : i32, i32
  }
  func.func @transform_1(%arg0: i32, %arg1: i32, %arg2: i32) -> (i32, i32) {
    %c0_i32 = arith.constant 0 : i32
    return %arg2, %arg1 : i32, i32
  }
  func.func @transform_2(%arg0: i32, %arg1: i32, %arg2: i32) -> (i32, i32) {
    %c0_i32 = arith.constant 0 : i32
    %c0_i32_0 = arith.constant 0 : i32
    return %c0_i32, %arg1 : i32, i32
  }
  func.func @transform_3(%arg0: i32, %arg1: i32, %arg2: i32) -> (i32, i32) {
    %c0_i32 = arith.constant 0 : i32
    return %arg0, %arg1 : i32, i32
  }
}

module attributes {stable_mosaic.version = 11 : i64} {
  func.func @_flash_attn_kernel(%arg0: i32, %arg1: i32, %arg2: i32, %arg3: memref<1x1xi32, #tpu.memory_space<smem>>, %arg4: memref<1x8x32xf32, #tpu.memory_space<vmem>>, %arg5: memref<1x8x32xf32, #tpu.memory_space<vmem>>, %arg6: memref<1x8x32xf32, #tpu.memory_space<vmem>>, %arg7: memref<8x8xf32, #tpu.memory_space<vmem>>, %arg8: memref<1x8x32xf32, #tpu.memory_space<vmem>>, %arg9: memref<4x8x1xf32, #tpu.memory_space<vmem>>, %arg10: memref<4x8x1xf32, #tpu.memory_space<vmem>>, %arg11: memref<4x8x8xf32, #tpu.memory_space<vmem>>) attributes {dimension_semantics = [#tpu.dimension_semantics<parallel>, #tpu.dimension_semantics<parallel>, #tpu.dimension_semantics<arbitrary>], iteration_bounds = array<i64: 2, 1, 1>, scalar_prefetch = 1 : i64, scratch_operands = 3 : i64, tpu.core_type = #tpu.core_type<tc>, window_params = [{transform_indices = @transform_0, window_bounds = array<i64: 1, 8, 32>}, {transform_indices = @transform_1, window_bounds = array<i64: 1, 8, 32>}, {transform_indices = @transform_2, window_bounds = array<i64: 1, 8, 32>}, {transform_indices = @transform_3, window_bounds = array<i64: 8, 8>}, {transform_indices = @transform_4, window_bounds = array<i64: 1, 8, 32>}]} {
    %c0_i32 = arith.constant 0 : i32
    %0 = arith.cmpi eq, %arg2, %c0_i32 : i32
    %1 = arith.extui %0 : i1 to i32
    %c0_i32_0 = arith.constant 0 : i32
    %2 = arith.cmpi ne, %1, %c0_i32_0 : i32
    scf.if %2 {
      %cst = arith.constant 0xFF800000 : f32
      %12 = vector.broadcast %cst : f32 to vector<4x8x1xf32>
      %c0 = arith.constant 0 : index
      %c0_5 = arith.constant 0 : index
      %c0_6 = arith.constant 0 : index
      %13 = vector.load %arg9[%c0, %c0_5, %c0_6] : memref<4x8x1xf32, #tpu.memory_space<vmem>>, vector<4x8x1xf32>
      tpu.vector_store %arg9[%c0, %c0_5, %c0_6], %12 {strides = array<i32>} : memref<4x8x1xf32, #tpu.memory_space<vmem>>, vector<4x8x1xf32>,
      %cst_7 = arith.constant 0.000000e+00 : f32
      %14 = vector.broadcast %cst_7 : f32 to vector<4x8x1xf32>
      %c0_8 = arith.constant 0 : index
      %c0_9 = arith.constant 0 : index
      %c0_10 = arith.constant 0 : index
      %15 = vector.load %arg10[%c0_8, %c0_9, %c0_10] : memref<4x8x1xf32, #tpu.memory_space<vmem>>, vector<4x8x1xf32>
      tpu.vector_store %arg10[%c0_8, %c0_9, %c0_10], %14 {strides = array<i32>} : memref<4x8x1xf32, #tpu.memory_space<vmem>>, vector<4x8x1xf32>,
      %cst_11 = arith.constant 0.000000e+00 : f32
      %16 = vector.broadcast %cst_11 : f32 to vector<4x8x8xf32>
      %c0_12 = arith.constant 0 : index
      %c0_13 = arith.constant 0 : index
      %c0_14 = arith.constant 0 : index
      %17 = vector.load %arg11[%c0_12, %c0_13, %c0_14] : memref<4x8x8xf32, #tpu.memory_space<vmem>>, vector<4x8x8xf32>
      tpu.vector_store %arg11[%c0_12, %c0_13, %c0_14], %16 {strides = array<i32>} : memref<4x8x8xf32, #tpu.memory_space<vmem>>, vector<4x8x8xf32>,
    } else {
    }
    %3 = arith.index_cast %arg1 : i32 to index
    %4 = arith.index_cast %arg2 : i32 to index
    %5 = memref.load %arg3[%3, %4] : memref<1x1xi32, #tpu.memory_space<smem>>
    %c0_i32_1 = arith.constant 0 : i32
    %6 = arith.cmpi sgt, %5, %c0_i32_1 : i32
    %7 = arith.extui %6 : i1 to i32
    %c0_i32_2 = arith.constant 0 : i32
    %8 = arith.cmpi ne, %7, %c0_i32_2 : i32
    scf.if %8 {
      %c0 = arith.constant 0 : index
      %c0_5 = arith.constant 0 : index
      %c0_6 = arith.constant 0 : index
      %12 = vector.load %arg4[%c0, %c0_5, %c0_6] : memref<1x8x32xf32, #tpu.memory_space<vmem>>, vector<1x8x32xf32>
      %13 = vector.shape_cast %12 : vector<1x8x32xf32> to vector<8x32xf32>
      %c0_7 = arith.constant 0 : index
      %c0_8 = arith.constant 0 : index
      %c0_9 = arith.constant 0 : index
      %14 = vector.load %arg5[%c0_7, %c0_8, %c0_9] : memref<1x8x32xf32, #tpu.memory_space<vmem>>, vector<1x8x32xf32>
      %15 = vector.shape_cast %14 : vector<1x8x32xf32> to vector<8x32xf32>
      %c0_10 = arith.constant 0 : index
      %c0_11 = arith.constant 0 : index
      %c0_12 = arith.constant 0 : index
      %16 = vector.load %arg6[%c0_10, %c0_11, %c0_12] : memref<1x8x32xf32, #tpu.memory_space<vmem>>, vector<1x8x32xf32>
      %17 = vector.shape_cast %16 : vector<1x8x32xf32> to vector<8x32xf32>
      %c0_13 = arith.constant 0 : index
      %c0_14 = arith.constant 0 : index
      %18 = vector.load %arg7[%c0_13, %c0_14] : memref<8x8xf32, #tpu.memory_space<vmem>>, vector<8x8xf32>
      %19 = vector.extract_strided_slice %13 {offsets = [0, 0], sizes = [8, 8], strides = [1, 1]} : vector<8x32xf32> to vector<8x8xf32>
      %20 = vector.extract_strided_slice %15 {offsets = [0, 0], sizes = [8, 8], strides = [1, 1]} : vector<8x32xf32> to vector<8x8xf32>
      %21 = vector.extract_strided_slice %17 {offsets = [0, 0], sizes = [8, 8], strides = [1, 1]} : vector<8x32xf32> to vector<8x8xf32>
      %cst = arith.constant dense<0.000000e+00> : vector<8x8xf32>
      %22 = tpu.matmul %19, %20, %cst {dimension_numbers = #tpu.dot_dimension_numbers<[1], [1], [0], [0], [0, 0, 1, 0], [], []>} : vector<8x8xf32>, vector<8x8xf32>, vector<8x8xf32> -> vector<8x8xf32>
      %23 = arith.addf %22, %18 : vector<8x8xf32>
      %c0_15 = arith.constant 0 : index
      %c0_16 = arith.constant 0 : index
      %c0_17 = arith.constant 0 : index
      %24 = vector.load %arg9[%c0_15, %c0_16, %c0_17] : memref<4x8x1xf32, #tpu.memory_space<vmem>>, vector<1x8x1xf32>
      %25 = vector.shape_cast %24 : vector<1x8x1xf32> to vector<8x1xf32>
      %cst_18 = arith.constant dense<0xFF800000> : vector<8xf32>
      %26 = vector.multi_reduction <maximumf>, %23, %cst_18 [1] : vector<8x8xf32> to vector<8xf32>
      %27 = vector.shape_cast %26 : vector<8xf32> to vector<8x1xf32>
      %28 = arith.maximumf %25, %27 : vector<8x1xf32>
      %29 = arith.subf %25, %28 : vector<8x1xf32>
      %30 = math.exp %29 : vector<8x1xf32>
      %31 = vector.broadcast %28 : vector<8x1xf32> to vector<8x8xf32>
      %32 = arith.subf %23, %31 : vector<8x8xf32>
      %33 = math.exp %32 : vector<8x8xf32>
      %c0_19 = arith.constant 0 : index
      %c0_20 = arith.constant 0 : index
      %c0_21 = arith.constant 0 : index
      %34 = vector.load %arg10[%c0_19, %c0_20, %c0_21] : memref<4x8x1xf32, #tpu.memory_space<vmem>>, vector<1x8x1xf32>
      %35 = vector.shape_cast %34 : vector<1x8x1xf32> to vector<8x1xf32>
      %36 = arith.mulf %30, %35 : vector<8x1xf32>
      %cst_22 = arith.constant dense<0.000000e+00> : vector<8xf32>
      %37 = vector.multi_reduction <add>, %33, %cst_22 [1] : vector<8x8xf32> to vector<8xf32>
      %38 = vector.shape_cast %37 : vector<8xf32> to vector<8x1xf32>
      %39 = arith.addf %36, %38 : vector<8x1xf32>
      %c0_23 = arith.constant 0 : index
      %c0_24 = arith.constant 0 : index
      %c0_25 = arith.constant 0 : index
      %40 = vector.load %arg10[%c0_23, %c0_24, %c0_25] : memref<4x8x1xf32, #tpu.memory_space<vmem>>, vector<1x8x1xf32>
      %41 = vector.shape_cast %40 : vector<1x8x1xf32> to vector<8x1xf32>
      %42 = vector.shape_cast %39 : vector<8x1xf32> to vector<1x8x1xf32>
      tpu.vector_store %arg10[%c0_23, %c0_24, %c0_25], %42 {strides = array<i32>} : memref<4x8x1xf32, #tpu.memory_space<vmem>>, vector<1x8x1xf32>,
      %c0_26 = arith.constant 0 : index
      %c0_27 = arith.constant 0 : index
      %c0_28 = arith.constant 0 : index
      %43 = vector.load %arg11[%c0_26, %c0_27, %c0_28] : memref<4x8x8xf32, #tpu.memory_space<vmem>>, vector<1x8x8xf32>
      %44 = vector.shape_cast %43 : vector<1x8x8xf32> to vector<8x8xf32>
      %45 = vector.broadcast %30 : vector<8x1xf32> to vector<8x8xf32>
      %46 = arith.mulf %45, %44 : vector<8x8xf32>
      %cst_29 = arith.constant dense<0.000000e+00> : vector<8x8xf32>
      %47 = tpu.matmul %33, %21, %cst_29 {dimension_numbers = #tpu.dot_dimension_numbers<[1], [0], [0], [1], [0, 0, 1, 1], [], []>} : vector<8x8xf32>, vector<8x8xf32>, vector<8x8xf32> -> vector<8x8xf32>
      %48 = arith.addf %46, %47 : vector<8x8xf32>
      %c0_30 = arith.constant 0 : index
      %c0_31 = arith.constant 0 : index
      %c0_32 = arith.constant 0 : index
      %49 = vector.load %arg11[%c0_30, %c0_31, %c0_32] : memref<4x8x8xf32, #tpu.memory_space<vmem>>, vector<1x8x8xf32>
      %50 = vector.shape_cast %49 : vector<1x8x8xf32> to vector<8x8xf32>
      %51 = vector.shape_cast %48 : vector<8x8xf32> to vector<1x8x8xf32>
      tpu.vector_store %arg11[%c0_30, %c0_31, %c0_32], %51 {strides = array<i32>} : memref<4x8x8xf32, #tpu.memory_space<vmem>>, vector<1x8x8xf32>,
      %c0_33 = arith.constant 0 : index
      %c0_34 = arith.constant 0 : index
      %c0_35 = arith.constant 0 : index
      %52 = vector.load %arg9[%c0_33, %c0_34, %c0_35] : memref<4x8x1xf32, #tpu.memory_space<vmem>>, vector<1x8x1xf32>
      %53 = vector.shape_cast %52 : vector<1x8x1xf32> to vector<8x1xf32>
      %54 = vector.shape_cast %28 : vector<8x1xf32> to vector<1x8x1xf32>
      tpu.vector_store %arg9[%c0_33, %c0_34, %c0_35], %54 {strides = array<i32>} : memref<4x8x1xf32, #tpu.memory_space<vmem>>, vector<1x8x1xf32>,
      %55 = vector.extract_strided_slice %13 {offsets = [0, 8], sizes = [8, 8], strides = [1, 1]} : vector<8x32xf32> to vector<8x8xf32>
      %56 = vector.extract_strided_slice %15 {offsets = [0, 8], sizes = [8, 8], strides = [1, 1]} : vector<8x32xf32> to vector<8x8xf32>
      %57 = vector.extract_strided_slice %17 {offsets = [0, 8], sizes = [8, 8], strides = [1, 1]} : vector<8x32xf32> to vector<8x8xf32>
      %cst_36 = arith.constant dense<0.000000e+00> : vector<8x8xf32>
      %58 = tpu.matmul %55, %56, %cst_36 {dimension_numbers = #tpu.dot_dimension_numbers<[1], [1], [0], [0], [0, 0, 1, 0], [], []>} : vector<8x8xf32>, vector<8x8xf32>, vector<8x8xf32> -> vector<8x8xf32>
      %59 = arith.addf %58, %18 : vector<8x8xf32>
      %c1 = arith.constant 1 : index
      %c0_37 = arith.constant 0 : index
      %c0_38 = arith.constant 0 : index
      %60 = vector.load %arg9[%c1, %c0_37, %c0_38] : memref<4x8x1xf32, #tpu.memory_space<vmem>>, vector<1x8x1xf32>
      %61 = vector.shape_cast %60 : vector<1x8x1xf32> to vector<8x1xf32>
      %cst_39 = arith.constant dense<0xFF800000> : vector<8xf32>
      %62 = vector.multi_reduction <maximumf>, %59, %cst_39 [1] : vector<8x8xf32> to vector<8xf32>
      %63 = vector.shape_cast %62 : vector<8xf32> to vector<8x1xf32>
      %64 = arith.maximumf %61, %63 : vector<8x1xf32>
      %65 = arith.subf %61, %64 : vector<8x1xf32>
      %66 = math.exp %65 : vector<8x1xf32>
      %67 = vector.broadcast %64 : vector<8x1xf32> to vector<8x8xf32>
      %68 = arith.subf %59, %67 : vector<8x8xf32>
      %69 = math.exp %68 : vector<8x8xf32>
      %c1_40 = arith.constant 1 : index
      %c0_41 = arith.constant 0 : index
      %c0_42 = arith.constant 0 : index
      %70 = vector.load %arg10[%c1_40, %c0_41, %c0_42] : memref<4x8x1xf32, #tpu.memory_space<vmem>>, vector<1x8x1xf32>
      %71 = vector.shape_cast %70 : vector<1x8x1xf32> to vector<8x1xf32>
      %72 = arith.mulf %66, %71 : vector<8x1xf32>
      %cst_43 = arith.constant dense<0.000000e+00> : vector<8xf32>
      %73 = vector.multi_reduction <add>, %69, %cst_43 [1] : vector<8x8xf32> to vector<8xf32>
      %74 = vector.shape_cast %73 : vector<8xf32> to vector<8x1xf32>
      %75 = arith.addf %72, %74 : vector<8x1xf32>
      %c1_44 = arith.constant 1 : index
      %c0_45 = arith.constant 0 : index
      %c0_46 = arith.constant 0 : index
      %76 = vector.load %arg10[%c1_44, %c0_45, %c0_46] : memref<4x8x1xf32, #tpu.memory_space<vmem>>, vector<1x8x1xf32>
      %77 = vector.shape_cast %76 : vector<1x8x1xf32> to vector<8x1xf32>
      %78 = vector.shape_cast %75 : vector<8x1xf32> to vector<1x8x1xf32>
      tpu.vector_store %arg10[%c1_44, %c0_45, %c0_46], %78 {strides = array<i32>} : memref<4x8x1xf32, #tpu.memory_space<vmem>>, vector<1x8x1xf32>,
      %c1_47 = arith.constant 1 : index
      %c0_48 = arith.constant 0 : index
      %c0_49 = arith.constant 0 : index
      %79 = vector.load %arg11[%c1_47, %c0_48, %c0_49] : memref<4x8x8xf32, #tpu.memory_space<vmem>>, vector<1x8x8xf32>
      %80 = vector.shape_cast %79 : vector<1x8x8xf32> to vector<8x8xf32>
      %81 = vector.broadcast %66 : vector<8x1xf32> to vector<8x8xf32>
      %82 = arith.mulf %81, %80 : vector<8x8xf32>
      %cst_50 = arith.constant dense<0.000000e+00> : vector<8x8xf32>
      %83 = tpu.matmul %69, %57, %cst_50 {dimension_numbers = #tpu.dot_dimension_numbers<[1], [0], [0], [1], [0, 0, 1, 1], [], []>} : vector<8x8xf32>, vector<8x8xf32>, vector<8x8xf32> -> vector<8x8xf32>
      %84 = arith.addf %82, %83 : vector<8x8xf32>
      %c1_51 = arith.constant 1 : index
      %c0_52 = arith.constant 0 : index
      %c0_53 = arith.constant 0 : index
      %85 = vector.load %arg11[%c1_51, %c0_52, %c0_53] : memref<4x8x8xf32, #tpu.memory_space<vmem>>, vector<1x8x8xf32>
      %86 = vector.shape_cast %85 : vector<1x8x8xf32> to vector<8x8xf32>
      %87 = vector.shape_cast %84 : vector<8x8xf32> to vector<1x8x8xf32>
      tpu.vector_store %arg11[%c1_51, %c0_52, %c0_53], %87 {strides = array<i32>} : memref<4x8x8xf32, #tpu.memory_space<vmem>>, vector<1x8x8xf32>,
      %c1_54 = arith.constant 1 : index
      %c0_55 = arith.constant 0 : index
      %c0_56 = arith.constant 0 : index
      %88 = vector.load %arg9[%c1_54, %c0_55, %c0_56] : memref<4x8x1xf32, #tpu.memory_space<vmem>>, vector<1x8x1xf32>
      %89 = vector.shape_cast %88 : vector<1x8x1xf32> to vector<8x1xf32>
      %90 = vector.shape_cast %64 : vector<8x1xf32> to vector<1x8x1xf32>
      tpu.vector_store %arg9[%c1_54, %c0_55, %c0_56], %90 {strides = array<i32>} : memref<4x8x1xf32, #tpu.memory_space<vmem>>, vector<1x8x1xf32>,
      %91 = vector.extract_strided_slice %13 {offsets = [0, 16], sizes = [8, 8], strides = [1, 1]} : vector<8x32xf32> to vector<8x8xf32>
      %92 = vector.extract_strided_slice %15 {offsets = [0, 16], sizes = [8, 8], strides = [1, 1]} : vector<8x32xf32> to vector<8x8xf32>
      %93 = vector.extract_strided_slice %17 {offsets = [0, 16], sizes = [8, 8], strides = [1, 1]} : vector<8x32xf32> to vector<8x8xf32>
      %cst_57 = arith.constant dense<0.000000e+00> : vector<8x8xf32>
      %94 = tpu.matmul %91, %92, %cst_57 {dimension_numbers = #tpu.dot_dimension_numbers<[1], [1], [0], [0], [0, 0, 1, 0], [], []>} : vector<8x8xf32>, vector<8x8xf32>, vector<8x8xf32> -> vector<8x8xf32>
      %95 = arith.addf %94, %18 : vector<8x8xf32>
      %c2 = arith.constant 2 : index
      %c0_58 = arith.constant 0 : index
      %c0_59 = arith.constant 0 : index
      %96 = vector.load %arg9[%c2, %c0_58, %c0_59] : memref<4x8x1xf32, #tpu.memory_space<vmem>>, vector<1x8x1xf32>
      %97 = vector.shape_cast %96 : vector<1x8x1xf32> to vector<8x1xf32>
      %cst_60 = arith.constant dense<0xFF800000> : vector<8xf32>
      %98 = vector.multi_reduction <maximumf>, %95, %cst_60 [1] : vector<8x8xf32> to vector<8xf32>
      %99 = vector.shape_cast %98 : vector<8xf32> to vector<8x1xf32>
      %100 = arith.maximumf %97, %99 : vector<8x1xf32>
      %101 = arith.subf %97, %100 : vector<8x1xf32>
      %102 = math.exp %101 : vector<8x1xf32>
      %103 = vector.broadcast %100 : vector<8x1xf32> to vector<8x8xf32>
      %104 = arith.subf %95, %103 : vector<8x8xf32>
      %105 = math.exp %104 : vector<8x8xf32>
      %c2_61 = arith.constant 2 : index
      %c0_62 = arith.constant 0 : index
      %c0_63 = arith.constant 0 : index
      %106 = vector.load %arg10[%c2_61, %c0_62, %c0_63] : memref<4x8x1xf32, #tpu.memory_space<vmem>>, vector<1x8x1xf32>
      %107 = vector.shape_cast %106 : vector<1x8x1xf32> to vector<8x1xf32>
      %108 = arith.mulf %102, %107 : vector<8x1xf32>
      %cst_64 = arith.constant dense<0.000000e+00> : vector<8xf32>
      %109 = vector.multi_reduction <add>, %105, %cst_64 [1] : vector<8x8xf32> to vector<8xf32>
      %110 = vector.shape_cast %109 : vector<8xf32> to vector<8x1xf32>
      %111 = arith.addf %108, %110 : vector<8x1xf32>
      %c2_65 = arith.constant 2 : index
      %c0_66 = arith.constant 0 : index
      %c0_67 = arith.constant 0 : index
      %112 = vector.load %arg10[%c2_65, %c0_66, %c0_67] : memref<4x8x1xf32, #tpu.memory_space<vmem>>, vector<1x8x1xf32>
      %113 = vector.shape_cast %112 : vector<1x8x1xf32> to vector<8x1xf32>
      %114 = vector.shape_cast %111 : vector<8x1xf32> to vector<1x8x1xf32>
      tpu.vector_store %arg10[%c2_65, %c0_66, %c0_67], %114 {strides = array<i32>} : memref<4x8x1xf32, #tpu.memory_space<vmem>>, vector<1x8x1xf32>,
      %c2_68 = arith.constant 2 : index
      %c0_69 = arith.constant 0 : index
      %c0_70 = arith.constant 0 : index
      %115 = vector.load %arg11[%c2_68, %c0_69, %c0_70] : memref<4x8x8xf32, #tpu.memory_space<vmem>>, vector<1x8x8xf32>
      %116 = vector.shape_cast %115 : vector<1x8x8xf32> to vector<8x8xf32>
      %117 = vector.broadcast %102 : vector<8x1xf32> to vector<8x8xf32>
      %118 = arith.mulf %117, %116 : vector<8x8xf32>
      %cst_71 = arith.constant dense<0.000000e+00> : vector<8x8xf32>
      %119 = tpu.matmul %105, %93, %cst_71 {dimension_numbers = #tpu.dot_dimension_numbers<[1], [0], [0], [1], [0, 0, 1, 1], [], []>} : vector<8x8xf32>, vector<8x8xf32>, vector<8x8xf32> -> vector<8x8xf32>
      %120 = arith.addf %118, %119 : vector<8x8xf32>
      %c2_72 = arith.constant 2 : index
      %c0_73 = arith.constant 0 : index
      %c0_74 = arith.constant 0 : index
      %121 = vector.load %arg11[%c2_72, %c0_73, %c0_74] : memref<4x8x8xf32, #tpu.memory_space<vmem>>, vector<1x8x8xf32>
      %122 = vector.shape_cast %121 : vector<1x8x8xf32> to vector<8x8xf32>
      %123 = vector.shape_cast %120 : vector<8x8xf32> to vector<1x8x8xf32>
      tpu.vector_store %arg11[%c2_72, %c0_73, %c0_74], %123 {strides = array<i32>} : memref<4x8x8xf32, #tpu.memory_space<vmem>>, vector<1x8x8xf32>,
      %c2_75 = arith.constant 2 : index
      %c0_76 = arith.constant 0 : index
      %c0_77 = arith.constant 0 : index
      %124 = vector.load %arg9[%c2_75, %c0_76, %c0_77] : memref<4x8x1xf32, #tpu.memory_space<vmem>>, vector<1x8x1xf32>
      %125 = vector.shape_cast %124 : vector<1x8x1xf32> to vector<8x1xf32>
      %126 = vector.shape_cast %100 : vector<8x1xf32> to vector<1x8x1xf32>
      tpu.vector_store %arg9[%c2_75, %c0_76, %c0_77], %126 {strides = array<i32>} : memref<4x8x1xf32, #tpu.memory_space<vmem>>, vector<1x8x1xf32>,
      %127 = vector.extract_strided_slice %13 {offsets = [0, 24], sizes = [8, 8], strides = [1, 1]} : vector<8x32xf32> to vector<8x8xf32>
      %128 = vector.extract_strided_slice %15 {offsets = [0, 24], sizes = [8, 8], strides = [1, 1]} : vector<8x32xf32> to vector<8x8xf32>
      %129 = vector.extract_strided_slice %17 {offsets = [0, 24], sizes = [8, 8], strides = [1, 1]} : vector<8x32xf32> to vector<8x8xf32>
      %cst_78 = arith.constant dense<0.000000e+00> : vector<8x8xf32>
      %130 = tpu.matmul %127, %128, %cst_78 {dimension_numbers = #tpu.dot_dimension_numbers<[1], [1], [0], [0], [0, 0, 1, 0], [], []>} : vector<8x8xf32>, vector<8x8xf32>, vector<8x8xf32> -> vector<8x8xf32>
      %131 = arith.addf %130, %18 : vector<8x8xf32>
      %c3 = arith.constant 3 : index
      %c0_79 = arith.constant 0 : index
      %c0_80 = arith.constant 0 : index
      %132 = vector.load %arg9[%c3, %c0_79, %c0_80] : memref<4x8x1xf32, #tpu.memory_space<vmem>>, vector<1x8x1xf32>
      %133 = vector.shape_cast %132 : vector<1x8x1xf32> to vector<8x1xf32>
      %cst_81 = arith.constant dense<0xFF800000> : vector<8xf32>
      %134 = vector.multi_reduction <maximumf>, %131, %cst_81 [1] : vector<8x8xf32> to vector<8xf32>
      %135 = vector.shape_cast %134 : vector<8xf32> to vector<8x1xf32>
      %136 = arith.maximumf %133, %135 : vector<8x1xf32>
      %137 = arith.subf %133, %136 : vector<8x1xf32>
      %138 = math.exp %137 : vector<8x1xf32>
      %139 = vector.broadcast %136 : vector<8x1xf32> to vector<8x8xf32>
      %140 = arith.subf %131, %139 : vector<8x8xf32>
      %141 = math.exp %140 : vector<8x8xf32>
      %c3_82 = arith.constant 3 : index
      %c0_83 = arith.constant 0 : index
      %c0_84 = arith.constant 0 : index
      %142 = vector.load %arg10[%c3_82, %c0_83, %c0_84] : memref<4x8x1xf32, #tpu.memory_space<vmem>>, vector<1x8x1xf32>
      %143 = vector.shape_cast %142 : vector<1x8x1xf32> to vector<8x1xf32>
      %144 = arith.mulf %138, %143 : vector<8x1xf32>
      %cst_85 = arith.constant dense<0.000000e+00> : vector<8xf32>
      %145 = vector.multi_reduction <add>, %141, %cst_85 [1] : vector<8x8xf32> to vector<8xf32>
      %146 = vector.shape_cast %145 : vector<8xf32> to vector<8x1xf32>
      %147 = arith.addf %144, %146 : vector<8x1xf32>
      %c3_86 = arith.constant 3 : index
      %c0_87 = arith.constant 0 : index
      %c0_88 = arith.constant 0 : index
      %148 = vector.load %arg10[%c3_86, %c0_87, %c0_88] : memref<4x8x1xf32, #tpu.memory_space<vmem>>, vector<1x8x1xf32>
      %149 = vector.shape_cast %148 : vector<1x8x1xf32> to vector<8x1xf32>
      %150 = vector.shape_cast %147 : vector<8x1xf32> to vector<1x8x1xf32>
      tpu.vector_store %arg10[%c3_86, %c0_87, %c0_88], %150 {strides = array<i32>} : memref<4x8x1xf32, #tpu.memory_space<vmem>>, vector<1x8x1xf32>,
      %c3_89 = arith.constant 3 : index
      %c0_90 = arith.constant 0 : index
      %c0_91 = arith.constant 0 : index
      %151 = vector.load %arg11[%c3_89, %c0_90, %c0_91] : memref<4x8x8xf32, #tpu.memory_space<vmem>>, vector<1x8x8xf32>
      %152 = vector.shape_cast %151 : vector<1x8x8xf32> to vector<8x8xf32>
      %153 = vector.broadcast %138 : vector<8x1xf32> to vector<8x8xf32>
      %154 = arith.mulf %153, %152 : vector<8x8xf32>
      %cst_92 = arith.constant dense<0.000000e+00> : vector<8x8xf32>
      %155 = tpu.matmul %141, %129, %cst_92 {dimension_numbers = #tpu.dot_dimension_numbers<[1], [0], [0], [1], [0, 0, 1, 1], [], []>} : vector<8x8xf32>, vector<8x8xf32>, vector<8x8xf32> -> vector<8x8xf32>
      %156 = arith.addf %154, %155 : vector<8x8xf32>
      %c3_93 = arith.constant 3 : index
      %c0_94 = arith.constant 0 : index
      %c0_95 = arith.constant 0 : index
      %157 = vector.load %arg11[%c3_93, %c0_94, %c0_95] : memref<4x8x8xf32, #tpu.memory_space<vmem>>, vector<1x8x8xf32>
      %158 = vector.shape_cast %157 : vector<1x8x8xf32> to vector<8x8xf32>
      %159 = vector.shape_cast %156 : vector<8x8xf32> to vector<1x8x8xf32>
      tpu.vector_store %arg11[%c3_93, %c0_94, %c0_95], %159 {strides = array<i32>} : memref<4x8x8xf32, #tpu.memory_space<vmem>>, vector<1x8x8xf32>,
      %c3_96 = arith.constant 3 : index
      %c0_97 = arith.constant 0 : index
      %c0_98 = arith.constant 0 : index
      %160 = vector.load %arg9[%c3_96, %c0_97, %c0_98] : memref<4x8x1xf32, #tpu.memory_space<vmem>>, vector<1x8x1xf32>
      %161 = vector.shape_cast %160 : vector<1x8x1xf32> to vector<8x1xf32>
      %162 = vector.shape_cast %136 : vector<8x1xf32> to vector<1x8x1xf32>
      tpu.vector_store %arg9[%c3_96, %c0_97, %c0_98], %162 {strides = array<i32>} : memref<4x8x1xf32, #tpu.memory_space<vmem>>, vector<1x8x1xf32>,
    } else {
    }
    %c0_i32_3 = arith.constant 0 : i32
    %9 = arith.cmpi eq, %arg2, %c0_i32_3 : i32
    %10 = arith.extui %9 : i1 to i32
    %c0_i32_4 = arith.constant 0 : i32
    %11 = arith.cmpi ne, %10, %c0_i32_4 : i32
    scf.if %11 {
      %c0 = arith.constant 0 : index
      %c0_5 = arith.constant 0 : index
      %c0_6 = arith.constant 0 : index
      %12 = vector.load %arg10[%c0, %c0_5, %c0_6] : memref<4x8x1xf32, #tpu.memory_space<vmem>>, vector<1x8x1xf32>
      %13 = vector.shape_cast %12 : vector<1x8x1xf32> to vector<8x1xf32>
      %14 = tpu.reciprocal %13 : vector<8x1xf32> -> vector<8x1xf32>
      %c0_7 = arith.constant 0 : index
      %c0_8 = arith.constant 0 : index
      %c0_9 = arith.constant 0 : index
      %15 = vector.load %arg11[%c0_7, %c0_8, %c0_9] : memref<4x8x8xf32, #tpu.memory_space<vmem>>, vector<1x8x8xf32>
      %16 = vector.shape_cast %15 : vector<1x8x8xf32> to vector<8x8xf32>
      %17 = vector.broadcast %14 : vector<8x1xf32> to vector<8x8xf32>
      %18 = arith.mulf %16, %17 : vector<8x8xf32>
      %c1 = arith.constant 1 : index
      %c0_10 = arith.constant 0 : index
      %c0_11 = arith.constant 0 : index
      %19 = vector.load %arg10[%c1, %c0_10, %c0_11] : memref<4x8x1xf32, #tpu.memory_space<vmem>>, vector<1x8x1xf32>
      %20 = vector.shape_cast %19 : vector<1x8x1xf32> to vector<8x1xf32>
      %21 = tpu.reciprocal %20 : vector<8x1xf32> -> vector<8x1xf32>
      %c1_12 = arith.constant 1 : index
      %c0_13 = arith.constant 0 : index
      %c0_14 = arith.constant 0 : index
      %22 = vector.load %arg11[%c1_12, %c0_13, %c0_14] : memref<4x8x8xf32, #tpu.memory_space<vmem>>, vector<1x8x8xf32>
      %23 = vector.shape_cast %22 : vector<1x8x8xf32> to vector<8x8xf32>
      %24 = vector.broadcast %21 : vector<8x1xf32> to vector<8x8xf32>
      %25 = arith.mulf %23, %24 : vector<8x8xf32>
      %c2 = arith.constant 2 : index
      %c0_15 = arith.constant 0 : index
      %c0_16 = arith.constant 0 : index
      %26 = vector.load %arg10[%c2, %c0_15, %c0_16] : memref<4x8x1xf32, #tpu.memory_space<vmem>>, vector<1x8x1xf32>
      %27 = vector.shape_cast %26 : vector<1x8x1xf32> to vector<8x1xf32>
      %28 = tpu.reciprocal %27 : vector<8x1xf32> -> vector<8x1xf32>
      %c2_17 = arith.constant 2 : index
      %c0_18 = arith.constant 0 : index
      %c0_19 = arith.constant 0 : index
      %29 = vector.load %arg11[%c2_17, %c0_18, %c0_19] : memref<4x8x8xf32, #tpu.memory_space<vmem>>, vector<1x8x8xf32>
      %30 = vector.shape_cast %29 : vector<1x8x8xf32> to vector<8x8xf32>
      %31 = vector.broadcast %28 : vector<8x1xf32> to vector<8x8xf32>
      %32 = arith.mulf %30, %31 : vector<8x8xf32>
      %c3 = arith.constant 3 : index
      %c0_20 = arith.constant 0 : index
      %c0_21 = arith.constant 0 : index
      %33 = vector.load %arg10[%c3, %c0_20, %c0_21] : memref<4x8x1xf32, #tpu.memory_space<vmem>>, vector<1x8x1xf32>
      %34 = vector.shape_cast %33 : vector<1x8x1xf32> to vector<8x1xf32>
      %35 = tpu.reciprocal %34 : vector<8x1xf32> -> vector<8x1xf32>
      %c3_22 = arith.constant 3 : index
      %c0_23 = arith.constant 0 : index
      %c0_24 = arith.constant 0 : index
      %36 = vector.load %arg11[%c3_22, %c0_23, %c0_24] : memref<4x8x8xf32, #tpu.memory_space<vmem>>, vector<1x8x8xf32>
      %37 = vector.shape_cast %36 : vector<1x8x8xf32> to vector<8x8xf32>
      %38 = vector.broadcast %35 : vector<8x1xf32> to vector<8x8xf32>
      %39 = arith.mulf %37, %38 : vector<8x8xf32>
      %40 = tpu.concatenate %18, %25, %32, %39 in 1 : vector<8x8xf32>, vector<8x8xf32>, vector<8x8xf32>, vector<8x8xf32> -> vector<8x32xf32>
      %41 = arith.cmpf one, %40, %40 : vector<8x32xf32>
      %cst = arith.constant 0.000000e+00 : f32
      %42 = vector.broadcast %cst : f32 to vector<8x32xf32>
      %43 = arith.select %41, %42, %40 : vector<8x32xi1>, vector<8x32xf32>
      %c0_25 = arith.constant 0 : index
      %c0_26 = arith.constant 0 : index
      %c0_27 = arith.constant 0 : index
      %44 = vector.load %arg8[%c0_25, %c0_26, %c0_27] : memref<1x8x32xf32, #tpu.memory_space<vmem>>, vector<1x8x32xf32>
      %45 = vector.shape_cast %44 : vector<1x8x32xf32> to vector<8x32xf32>
      %46 = vector.shape_cast %43 : vector<8x32xf32> to vector<1x8x32xf32>
      tpu.vector_store %arg8[%c0_25, %c0_26, %c0_27], %46 {strides = array<i32>} : memref<1x8x32xf32, #tpu.memory_space<vmem>>, vector<1x8x32xf32>,
    } else {
    }
    return
  }
  func.func @transform_0(%arg0: i32, %arg1: i32, %arg2: i32, %arg3: memref<1x1xi32, #tpu.memory_space<smem>>) -> (i32, i32, i32) {
    %c0_i32 = arith.constant 0 : i32
    %c0_i32_0 = arith.constant 0 : i32
    return %arg0, %arg1, %c0_i32 : i32, i32, i32
  }
  func.func @transform_1(%arg0: i32, %arg1: i32, %arg2: i32, %arg3: memref<1x1xi32, #tpu.memory_space<smem>>) -> (i32, i32, i32) {
    %c0_i32 = arith.constant 0 : i32
    %c0_i32_0 = arith.constant 0 : i32
    return %arg0, %arg2, %c0_i32 : i32, i32, i32
  }
  func.func @transform_2(%arg0: i32, %arg1: i32, %arg2: i32, %arg3: memref<1x1xi32, #tpu.memory_space<smem>>) -> (i32, i32, i32) {
    %c0_i32 = arith.constant 0 : i32
    %c0_i32_0 = arith.constant 0 : i32
    return %arg0, %arg2, %c0_i32 : i32, i32, i32
  }
  func.func @transform_3(%arg0: i32, %arg1: i32, %arg2: i32, %arg3: memref<1x1xi32, #tpu.memory_space<smem>>) -> (i32, i32) {
    %c0_i32 = arith.constant 0 : i32
    return %arg1, %arg2 : i32, i32
  }
  func.func @transform_4(%arg0: i32, %arg1: i32, %arg2: i32, %arg3: memref<1x1xi32, #tpu.memory_space<smem>>) -> (i32, i32, i32) {
    %c0_i32 = arith.constant 0 : i32
    %c0_i32_0 = arith.constant 0 : i32
    return %arg0, %arg1, %c0_i32 : i32, i32, i32
  }
}

module attributes {stable_mosaic.version = 11 : i64} {
  func.func @_linear_kernel(%arg0: i32, %arg1: i32, %arg2: i32, %arg3: memref<16x32xf32, #tpu.memory_space<vmem>>, %arg4: memref<32x32xf32, #tpu.memory_space<vmem>>, %arg5: memref<1x32xf32, #tpu.memory_space<vmem>>, %arg6: memref<16x32xf32, #tpu.memory_space<vmem>>, %arg7: memref<16x32xf32, #tpu.memory_space<vmem>>) attributes {dimension_semantics = [#tpu.dimension_semantics<parallel>, #tpu.dimension_semantics<parallel>, #tpu.dimension_semantics<arbitrary>], iteration_bounds = array<i64: 1, 1, 1>, scalar_prefetch = 0 : i64, scratch_operands = 1 : i64, tpu.core_type = #tpu.core_type<tc>, window_params = [{transform_indices = @transform_0, window_bounds = array<i64: 16, 32>}, {transform_indices = @transform_1, window_bounds = array<i64: 32, 32>}, {transform_indices = @transform_2, window_bounds = array<i64: 1, 32>}, {transform_indices = @transform_3, window_bounds = array<i64: 16, 32>}]} {
    %c0_i32 = arith.constant 0 : i32
    %0 = arith.cmpi eq, %arg2, %c0_i32 : i32
    %1 = arith.extui %0 : i1 to i32
    %c0_i32_0 = arith.constant 0 : i32
    %2 = arith.cmpi ne, %1, %c0_i32_0 : i32
    scf.if %2 {
      %cst_10 = arith.constant 0.000000e+00 : f32
      %12 = vector.broadcast %cst_10 : f32 to vector<16x32xf32>
      %c0_11 = arith.constant 0 : index
      %c0_12 = arith.constant 0 : index
      %13 = vector.load %arg7[%c0_11, %c0_12] : memref<16x32xf32, #tpu.memory_space<vmem>>, vector<16x32xf32>
      tpu.vector_store %arg7[%c0_11, %c0_12], %12 {strides = array<i32>} : memref<16x32xf32, #tpu.memory_space<vmem>>, vector<16x32xf32>,
    } else {
    }
    %c0 = arith.constant 0 : index
    %c0_1 = arith.constant 0 : index
    %3 = vector.load %arg3[%c0, %c0_1] : memref<16x32xf32, #tpu.memory_space<vmem>>, vector<16x32xf32>
    %c0_2 = arith.constant 0 : index
    %c0_3 = arith.constant 0 : index
    %4 = vector.load %arg4[%c0_2, %c0_3] : memref<32x32xf32, #tpu.memory_space<vmem>>, vector<32x32xf32>
    %c0_4 = arith.constant 0 : index
    %c0_5 = arith.constant 0 : index
    %5 = vector.load %arg7[%c0_4, %c0_5] : memref<16x32xf32, #tpu.memory_space<vmem>>, vector<16x32xf32>
    %cst = arith.constant dense<0.000000e+00> : vector<16x32xf32>
    %6 = tpu.matmul %3, %4, %cst {dimension_numbers = #tpu.dot_dimension_numbers<[1], [0], [0], [1], [0, 0, 1, 1], [], []>} : vector<16x32xf32>, vector<32x32xf32>, vector<16x32xf32> -> vector<16x32xf32>
    %7 = arith.addf %5, %6 : vector<16x32xf32>
    %c0_6 = arith.constant 0 : index
    %c0_7 = arith.constant 0 : index
    %8 = vector.load %arg7[%c0_6, %c0_7] : memref<16x32xf32, #tpu.memory_space<vmem>>, vector<16x32xf32>
    tpu.vector_store %arg7[%c0_6, %c0_7], %7 {strides = array<i32>} : memref<16x32xf32, #tpu.memory_space<vmem>>, vector<16x32xf32>,
    %c0_i32_8 = arith.constant 0 : i32
    %9 = arith.cmpi eq, %arg2, %c0_i32_8 : i32
    %10 = arith.extui %9 : i1 to i32
    %c0_i32_9 = arith.constant 0 : i32
    %11 = arith.cmpi ne, %10, %c0_i32_9 : i32
    scf.if %11 {
      %c0_10 = arith.constant 0 : index
      %c0_11 = arith.constant 0 : index
      %12 = vector.load %arg7[%c0_10, %c0_11] : memref<16x32xf32, #tpu.memory_space<vmem>>, vector<16x32xf32>
      %c0_12 = arith.constant 0 : index
      %c0_13 = arith.constant 0 : index
      %13 = vector.load %arg5[%c0_12, %c0_13] : memref<1x32xf32, #tpu.memory_space<vmem>>, vector<1x32xf32>
      %14 = vector.broadcast %13 : vector<1x32xf32> to vector<16x32xf32>
      %15 = arith.addf %12, %14 : vector<16x32xf32>
      %c0_14 = arith.constant 0 : index
      %c0_15 = arith.constant 0 : index
      %16 = vector.load %arg6[%c0_14, %c0_15] : memref<16x32xf32, #tpu.memory_space<vmem>>, vector<16x32xf32>
      tpu.vector_store %arg6[%c0_14, %c0_15], %15 {strides = array<i32>} : memref<16x32xf32, #tpu.memory_space<vmem>>, vector<16x32xf32>,
    } else {
    }
    return
  }
  func.func @transform_0(%arg0: i32, %arg1: i32, %arg2: i32) -> (i32, i32) {
    %c0_i32 = arith.constant 0 : i32
    return %arg0, %arg2 : i32, i32
  }
  func.func @transform_1(%arg0: i32, %arg1: i32, %arg2: i32) -> (i32, i32) {
    %c0_i32 = arith.constant 0 : i32
    return %arg2, %arg1 : i32, i32
  }
  func.func @transform_2(%arg0: i32, %arg1: i32, %arg2: i32) -> (i32, i32) {
    %c0_i32 = arith.constant 0 : i32
    %c0_i32_0 = arith.constant 0 : i32
    return %c0_i32, %arg1 : i32, i32
  }
  func.func @transform_3(%arg0: i32, %arg1: i32, %arg2: i32) -> (i32, i32) {
    %c0_i32 = arith.constant 0 : i32
    return %arg0, %arg1 : i32, i32
  }
}

</mosaic_0001>

<llo_original>
// kernel: memory_efficient_attention_forward.5
$region0: #{memory_efficient_attention_forward.5}
  #allocation0 [shape = 'u32[]', space=smem, size = 0x4, offset = 0x4, fixed_abs, tag = 'smem constant byte address 0x4 - core index']
  #allocation1 [shape = 'u32[144,128]{1,0:T(1,128)}', space=vmem, size = 0x12000, scoped, tag = 'internal scratch']
  #allocation2 [shape = 'f32[16,32]{1,0:T(8,128)}', space=vmem, size = 0x2000, scoped, tag = 'scratch operand']
  %s0 = inlined_call_operand.vmem [shape: f32[16,32], index: 0, kind: input, shape index: {}]
  %s1 = inlined_call_operand.vmem [shape: f32[32,32], index: 1, kind: input, shape index: {}]
  %s2 = inlined_call_operand.vmem [shape: f32[1,32], index: 2, kind: input, shape index: {}]
  %s3 = inlined_call_operand.hbm [shape: f32[16,32], index: 3, kind: output, shape index: {}]
  %s4 = sld [smem:[#allocation0]]
  $region30: #{memory_efficient_attention_forward.5} parent=0
    _
  %s6 = ssub.s32 1, %s4
  %s7 = scalar_select 0, %s6, %s4
  $region1: #{memory_efficient_attention_forward.5} parent=0
    #allocation3 [shape = 'u8[8192]{0}', space=vmem, size = 0x2000, scoped, tag = 'output window, operand 0, single buffered']
    #allocation4 [shape = 's32[1]{0}', space=sflag, size = 0x4, scoped, tag = 'scoped memory for memory_efficient_attention_forward.5']
    %8 = vsyncpa [#allocation4], 0
    // Predicated region
    $region2: #{memory_efficient_attention_forward.5} parent=1 // pred_check
      _
    $region3: #{memory_efficient_attention_forward.5} parent=1 // pred_check_branch
      %10 = sbr.rel (0) target = $region5
    $region4: #{memory_efficient_attention_forward.5} parent=1 // pred_region
      _
    $region5: #{memory_efficient_attention_forward.5} parent=1 // pred_fallthru
      _
    // Predicated region
    $region6: #{memory_efficient_attention_forward.5} parent=1 // pred_check
      _
    $region7: #{memory_efficient_attention_forward.5} parent=1 // pred_check_branch
      %12 = sbr.rel (0) target = $region9
    $region8: #{memory_efficient_attention_forward.5} parent=1 // pred_region
      _
    $region9: #{memory_efficient_attention_forward.5} parent=1 // pred_fallthru
      _
    // Predicated region
    $region10: #{memory_efficient_attention_forward.5} parent=1 // pred_check
      _
    $region11: #{memory_efficient_attention_forward.5} parent=1 // pred_check_branch
      %14 = sbr.rel (0) target = $region13
    $region12: #{memory_efficient_attention_forward.5} parent=1 // pred_region
      _
    $region13: #{memory_efficient_attention_forward.5} parent=1 // pred_fallthru
      _
    %p15 = scmp.eq.s32.totalorder 0, 0
    // Predicated region
    $region14: #{memory_efficient_attention_forward.5} parent=1 // pred_check
      %p16 = pneg %p15
    $region15: #{memory_efficient_attention_forward.5} parent=1 // pred_check_branch
      %18 = sbr.rel (%p16) target = $region17
    $region16: #{memory_efficient_attention_forward.5} parent=1 // pred_region
      %vm19 = vcmask 261120
      %20 = vst.msk [vmem:[#allocation2] sm:$0xff] %vm19, 0.0
      %21 = vst.msk [vmem:[#allocation2 + $0x8] sm:$0xff] %vm19, 0.0
    $region17: #{memory_efficient_attention_forward.5} parent=1 // pred_fallthru
      _
    %v22 = vld [vmem:[%s0] sm:$0xff]
    %v23 = vld [vmem:[%s0 + $0x8] sm:$0xff]
    %v24 = vld [vmem:[%s1] sm:$0xff]
    %v25 = vld [vmem:[%s1 + $0x8] sm:$0xff]
    %v26 = vld [vmem:[%s1 + $0x10] sm:$0xff]
    %v27 = vld [vmem:[%s1 + $0x18] sm:$0xff]
    %v28 = vld [vmem:[#allocation2] sm:$0xff]
    %v29 = vld [vmem:[#allocation2 + $0x8] sm:$0xff]
    %vm30 = vcmask 261120
    %v32 = vsel %vm30, %v22, 0
    %v35 = vsel %vm30, %v23, 0
    %37 = vmatprep.subr.mxu0 0.0
    %38 = vmatpush1.msra.mxu0 0.0
    %39 = vmatprep.subr.mxu0 0.0
    %40 = vmatpush1.msra.mxu0 0.0
    %41 = vmatprep.subr.mxu0 0.0
    %42 = vmatpush1.msra.mxu0 0.0
    %43 = vmatprep.subr.mxu0 0.0
    %44 = vmatpush1.msra.mxu0 0.0
    %45 = vmatprep.subr.mxu0 0.0
    %46 = vmatpush1.msra.mxu0 0.0
    %47 = vmatprep.subr.mxu0 0.0
    %48 = vmatpush1.msra.mxu0 0.0
    %49 = vmatprep.subr.mxu0 0.0
    %50 = vmatpush1.msra.mxu0 0.0
    %51 = vmatprep.subr.mxu0 0.0
    %52 = vmatpush1.msra.mxu0 0.0
    %53 = vmatprep.subr.mxu0 0.0
    %54 = vmatpush1.msra.mxu0 0.0
    %55 = vmatprep.subr.mxu0 0.0
    %56 = vmatpush1.msra.mxu0 0.0
    %57 = vmatprep.subr.mxu0 0.0
    %58 = vmatpush1.msra.mxu0 0.0
    %59 = vmatprep.subr.mxu0 0.0
    %60 = vmatpush1.msra.mxu0 0.0
    %61 = vmatprep.subr.mxu0 0.0
    %62 = vmatpush1.msra.mxu0 %v27
    %63 = vmatprep.subr.mxu0 0.0
    %64 = vmatpush1.msra.mxu0 %v26
    %65 = vmatprep.subr.mxu0 0.0
    %66 = vmatpush1.msra.mxu0 %v25
    %67 = vmatprep.subr.mxu0 0.0
    %68 = vmatpush1.msra.mxu0 %v24
    %69 = vmatprep.subr.mxu0 0.0
    %70 = vmatpush2.msra.mxu0 0.0
    %71 = vmatprep.subr.mxu0 0.0
    %72 = vmatpush2.msra.mxu0 0.0
    %73 = vmatprep.subr.mxu0 0.0
    %74 = vmatpush2.msra.mxu0 0.0
    %75 = vmatprep.subr.mxu0 0.0
    %76 = vmatpush2.msra.mxu0 0.0
    %77 = vmatprep.subr.mxu0 0.0
    %78 = vmatpush2.msra.mxu0 0.0
    %79 = vmatprep.subr.mxu0 0.0
    %80 = vmatpush2.msra.mxu0 0.0
    %81 = vmatprep.subr.mxu0 0.0
    %82 = vmatpush2.msra.mxu0 0.0
    %83 = vmatprep.subr.mxu0 0.0
    %84 = vmatpush2.msra.mxu0 0.0
    %85 = vmatprep.subr.mxu0 0.0
    %86 = vmatpush2.msra.mxu0 0.0
    %87 = vmatprep.subr.mxu0 0.0
    %88 = vmatpush2.msra.mxu0 0.0
    %89 = vmatprep.subr.mxu0 0.0
    %90 = vmatpush2.msra.mxu0 0.0
    %91 = vmatprep.subr.mxu0 0.0
    %92 = vmatpush2.msra.mxu0 0.0
    %93 = vmatprep.subr.mxu0 0.0
    %94 = vmatpush2.msra.mxu0 0.0
    %95 = vmatprep.subr.mxu0 0.0
    %96 = vmatpush2.msra.mxu0 0.0
    %97 = vmatprep.subr.mxu0 0.0
    %98 = vmatpush2.msra.mxu0 0.0
    %99 = vmatprep.subr.mxu0 0.0
    %100 = vmatpush2.msra.mxu0 0.0
    %101 = vmatprep.mubr.f32.mxu0 0.0
    %102 = vmatmul.mubr.f32.gmra.mxu0 %v32
    %v103 = vpop.f32.mrf.mxu0
    %v104 = vadd.f32 0.0, %v103
    %v105 = vpop.f32.mrf.mxu0
    %106 = vmatprep.mubr.f32.mxu0 0.0
    %107 = vmatmul.mubr.f32.gmra.mxu0 %v35
    %v108 = vpop.f32.mrf.mxu0
    %v109 = vadd.f32 0.0, %v108
    %v110 = vpop.f32.mrf.mxu0
    %111 = vdwg.mxu0
    %v112 = vadd.f32 %v28, %v104
    %v113 = vadd.f32 %v29, %v109
    %114 = vst.msk [vmem:[#allocation2] sm:$0xff] %vm30, %v112
    %115 = vst.msk [vmem:[#allocation2 + $0x8] sm:$0xff] %vm30, %v113
    // Predicated region
    $region18: #{memory_efficient_attention_forward.5} parent=1 // pred_check
      %p116 = pneg %p15
    $region19: #{memory_efficient_attention_forward.5} parent=1 // pred_check_branch
      %118 = sbr.rel (%p116) target = $region21
    $region20: #{memory_efficient_attention_forward.5} parent=1 // pred_region
      %v119 = vld [vmem:[#allocation2] sm:$0xff]
      %v120 = vld [vmem:[#allocation2 + $0x8] sm:$0xff]
      %v121 = vld [vmem:[%s2] sm:$0x1]
      %v123 = vlaneseq
      %v124 = vshrl.u32 %v123, 7
      %v125 = vsub.s32 0, %v124
      %v126 = vrot.slane %v121, %v125
      %v128 = vadd.f32 %v119, %v126
      %v129 = vadd.f32 %v120, %v126
      %130 = vst.msk [vmem:[#allocation3] sm:$0xff] %vm30, %v128
      %131 = vst.msk [vmem:[#allocation3 + $0x8] sm:$0xff] %vm30, %v129
    $region21: #{memory_efficient_attention_forward.5} parent=1 // pred_fallthru
      _
    // Predicated region
    $region22: #{memory_efficient_attention_forward.5} parent=1 // pred_check
      _
    $region23: #{memory_efficient_attention_forward.5} parent=1 // pred_check_branch
      %133 = sbr.rel (0) target = $region25
    $region24: #{memory_efficient_attention_forward.5} parent=1 // pred_region
      %s135 = ssub.s32 256, 256
      %136 = vsyncadd [#allocation4], %s135
      %s137 = sshll.u32 [#allocation3], 4
      %s138 = int_to_ptr.vmem [resolvable:$true] %s137
      %143 = dma.vmem_to_hbm [thread:$0]  %s138, 256, %s3, [#allocation4], 128, 128, 8
    $region25: #{memory_efficient_attention_forward.5} parent=1 // pred_fallthru
      _
    // Predicated region
    $region26: #{memory_efficient_attention_forward.5} parent=1 // pred_check
      _
    $region27: #{memory_efficient_attention_forward.5} parent=1 // pred_check_branch
      %145 = sbr.rel (0) target = $region29
    $region28: #{memory_efficient_attention_forward.5} parent=1 // pred_region
      %146 = dma.done [#allocation4], 256
    $region29: #{memory_efficient_attention_forward.5} parent=1 // pred_fallthru
      _
    %147 = vsyncpa [#allocation4], 1

// kernel: memory_efficient_attention_forward.3
$region0: #{memory_efficient_attention_forward.3}
  #allocation0 [shape = 'u32[]', space=smem, size = 0x4, offset = 0x4, fixed_abs, tag = 'smem constant byte address 0x4 - core index']
  #allocation1 [shape = 'u32[144,128]{1,0:T(1,128)}', space=vmem, size = 0x12000, scoped, tag = 'internal scratch']
  #allocation2 [shape = 'f32[16,96]{1,0:T(8,128)}', space=vmem, size = 0x2000, scoped, tag = 'scratch operand']
  %s0 = inlined_call_operand.hbm [shape: f32[16,32], index: 0, kind: input, shape index: {}]
  %s1 = inlined_call_operand.hbm [shape: f32[32,96], index: 1, kind: input, shape index: {}]
  %s2 = inlined_call_operand.vmem [shape: f32[1,96], index: 2, kind: input, shape index: {}]
  %s3 = inlined_call_operand.vmem [shape: f32[16,96], index: 3, kind: output, shape index: {}]
  %s4 = sld [smem:[#allocation0]]
  $region38: #{memory_efficient_attention_forward.3} parent=0
    _
  %s6 = ssub.s32 1, %s4
  %s7 = scalar_select 0, %s6, %s4
  $region1: #{memory_efficient_attention_forward.3} parent=0
    #allocation3 [shape = 'u8[8192]{0}', space=vmem, size = 0x2000, scoped, tag = 'input window, operand 0, single buffered']
    #allocation4 [shape = 's32[1]{0}', space=sflag, size = 0x4, scoped, tag = 'scoped memory for memory_efficient_attention_forward.3']
    #allocation5 [shape = 'u8[16384]{0}', space=vmem, size = 0x4000, scoped, tag = 'input window, operand 1, single buffered']
    #allocation6 [shape = 's32[1]{0}', space=sflag, size = 0x4, scoped, tag = 'scoped memory for memory_efficient_attention_forward.3']
    %8 = vsyncpa [#allocation4], 0
    %9 = vsyncpa [#allocation6], 0
    // Predicated region
    $region2: #{memory_efficient_attention_forward.3} parent=1 // pred_check
      _
    $region3: #{memory_efficient_attention_forward.3} parent=1 // pred_check_branch
      %11 = sbr.rel (0) target = $region5
    $region4: #{memory_efficient_attention_forward.3} parent=1 // pred_region
      %s13 = ssub.s32 256, 256
      %14 = vsyncadd [#allocation4], %s13
      %s15 = sshll.u32 [#allocation3], 4
      %s16 = int_to_ptr.vmem [resolvable:$true] %s15
      %21 = dma.hbm_to_vmem [thread:$0]  %s0, 256, %s16, [#allocation4], 128, 128, 8
    $region5: #{memory_efficient_attention_forward.3} parent=1 // pred_fallthru
      _
    // Predicated region
    $region6: #{memory_efficient_attention_forward.3} parent=1 // pred_check
      _
    $region7: #{memory_efficient_attention_forward.3} parent=1 // pred_check_branch
      %23 = sbr.rel (0) target = $region9
    $region8: #{memory_efficient_attention_forward.3} parent=1 // pred_region
      %s25 = ssub.s32 512, 512
      %26 = vsyncadd [#allocation6], %s25
      %s27 = sshll.u32 [#allocation5], 4
      %s28 = int_to_ptr.vmem [resolvable:$true] %s27
      %33 = dma.hbm_to_vmem [thread:$0]  %s1, 512, %s28, [#allocation6], 128, 128, 8
    $region9: #{memory_efficient_attention_forward.3} parent=1 // pred_fallthru
      _
    // Predicated region
    $region10: #{memory_efficient_attention_forward.3} parent=1 // pred_check
      _
    $region11: #{memory_efficient_attention_forward.3} parent=1 // pred_check_branch
      %35 = sbr.rel (0) target = $region13
    $region12: #{memory_efficient_attention_forward.3} parent=1 // pred_region
      _
    $region13: #{memory_efficient_attention_forward.3} parent=1 // pred_fallthru
      _
    // Predicated region
    $region14: #{memory_efficient_attention_forward.3} parent=1 // pred_check
      _
    $region15: #{memory_efficient_attention_forward.3} parent=1 // pred_check_branch
      %37 = sbr.rel (0) target = $region17
    $region16: #{memory_efficient_attention_forward.3} parent=1 // pred_region
      %38 = dma.done [#allocation4], 256
    $region17: #{memory_efficient_attention_forward.3} parent=1 // pred_fallthru
      _
    // Predicated region
    $region18: #{memory_efficient_attention_forward.3} parent=1 // pred_check
      _
    $region19: #{memory_efficient_attention_forward.3} parent=1 // pred_check_branch
      %40 = sbr.rel (0) target = $region21
    $region20: #{memory_efficient_attention_forward.3} parent=1 // pred_region
      %41 = dma.done [#allocation6], 512
    $region21: #{memory_efficient_attention_forward.3} parent=1 // pred_fallthru
      _
    %p42 = scmp.eq.s32.totalorder 0, 0
    // Predicated region
    $region22: #{memory_efficient_attention_forward.3} parent=1 // pred_check
      %p43 = pneg %p42
    $region23: #{memory_efficient_attention_forward.3} parent=1 // pred_check_branch
      %45 = sbr.rel (%p43) target = $region25
    $region24: #{memory_efficient_attention_forward.3} parent=1 // pred_region
      %vm46 = vcmask 785408
      %47 = vst.msk [vmem:[#allocation2] sm:$0xff] %vm46, 0.0
      %48 = vst.msk [vmem:[#allocation2 + $0x8] sm:$0xff] %vm46, 0.0
    $region25: #{memory_efficient_attention_forward.3} parent=1 // pred_fallthru
      _
    %v49 = vld [vmem:[#allocation3] sm:$0xff]
    %v50 = vld [vmem:[#allocation3 + $0x8] sm:$0xff]
    %v51 = vld [vmem:[#allocation5] sm:$0xff]
    %v52 = vld [vmem:[#allocation5 + $0x8] sm:$0xff]
    %v53 = vld [vmem:[#allocation5 + $0x10] sm:$0xff]
    %v54 = vld [vmem:[#allocation5 + $0x18] sm:$0xff]
    %v55 = vld [vmem:[#allocation2] sm:$0xff]
    %v56 = vld [vmem:[#allocation2 + $0x8] sm:$0xff]
    %vm57 = vcmask 261120
    %v59 = vsel %vm57, %v49, 0
    %v62 = vsel %vm57, %v50, 0
    %64 = vmatprep.subr.mxu0 0.0
    %65 = vmatpush1.msra.mxu0 0.0
    %66 = vmatprep.subr.mxu0 0.0
    %67 = vmatpush1.msra.mxu0 0.0
    %68 = vmatprep.subr.mxu0 0.0
    %69 = vmatpush1.msra.mxu0 0.0
    %70 = vmatprep.subr.mxu0 0.0
    %71 = vmatpush1.msra.mxu0 0.0
    %72 = vmatprep.subr.mxu0 0.0
    %73 = vmatpush1.msra.mxu0 0.0
    %74 = vmatprep.subr.mxu0 0.0
    %75 = vmatpush1.msra.mxu0 0.0
    %76 = vmatprep.subr.mxu0 0.0
    %77 = vmatpush1.msra.mxu0 0.0
    %78 = vmatprep.subr.mxu0 0.0
    %79 = vmatpush1.msra.mxu0 0.0
    %80 = vmatprep.subr.mxu0 0.0
    %81 = vmatpush1.msra.mxu0 0.0
    %82 = vmatprep.subr.mxu0 0.0
    %83 = vmatpush1.msra.mxu0 0.0
    %84 = vmatprep.subr.mxu0 0.0
    %85 = vmatpush1.msra.mxu0 0.0
    %86 = vmatprep.subr.mxu0 0.0
    %87 = vmatpush1.msra.mxu0 0.0
    %88 = vmatprep.subr.mxu0 0.0
    %89 = vmatpush1.msra.mxu0 %v54
    %90 = vmatprep.subr.mxu0 0.0
    %91 = vmatpush1.msra.mxu0 %v53
    %92 = vmatprep.subr.mxu0 0.0
    %93 = vmatpush1.msra.mxu0 %v52
    %94 = vmatprep.subr.mxu0 0.0
    %95 = vmatpush1.msra.mxu0 %v51
    %96 = vmatprep.subr.mxu0 0.0
    %97 = vmatpush2.msra.mxu0 0.0
    %98 = vmatprep.subr.mxu0 0.0
    %99 = vmatpush2.msra.mxu0 0.0
    %100 = vmatprep.subr.mxu0 0.0
    %101 = vmatpush2.msra.mxu0 0.0
    %102 = vmatprep.subr.mxu0 0.0
    %103 = vmatpush2.msra.mxu0 0.0
    %104 = vmatprep.subr.mxu0 0.0
    %105 = vmatpush2.msra.mxu0 0.0
    %106 = vmatprep.subr.mxu0 0.0
    %107 = vmatpush2.msra.mxu0 0.0
    %108 = vmatprep.subr.mxu0 0.0
    %109 = vmatpush2.msra.mxu0 0.0
    %110 = vmatprep.subr.mxu0 0.0
    %111 = vmatpush2.msra.mxu0 0.0
    %112 = vmatprep.subr.mxu0 0.0
    %113 = vmatpush2.msra.mxu0 0.0
    %114 = vmatprep.subr.mxu0 0.0
    %115 = vmatpush2.msra.mxu0 0.0
    %116 = vmatprep.subr.mxu0 0.0
    %117 = vmatpush2.msra.mxu0 0.0
    %118 = vmatprep.subr.mxu0 0.0
    %119 = vmatpush2.msra.mxu0 0.0
    %120 = vmatprep.subr.mxu0 0.0
    %121 = vmatpush2.msra.mxu0 0.0
    %122 = vmatprep.subr.mxu0 0.0
    %123 = vmatpush2.msra.mxu0 0.0
    %124 = vmatprep.subr.mxu0 0.0
    %125 = vmatpush2.msra.mxu0 0.0
    %126 = vmatprep.subr.mxu0 0.0
    %127 = vmatpush2.msra.mxu0 0.0
    %128 = vmatprep.mubr.f32.mxu0 0.0
    %129 = vmatmul.mubr.f32.gmra.mxu0 %v59
    %v130 = vpop.f32.mrf.mxu0
    %v131 = vadd.f32 0.0, %v130
    %v132 = vpop.f32.mrf.mxu0
    %133 = vmatprep.mubr.f32.mxu0 0.0
    %134 = vmatmul.mubr.f32.gmra.mxu0 %v62
    %v135 = vpop.f32.mrf.mxu0
    %v136 = vadd.f32 0.0, %v135
    %v137 = vpop.f32.mrf.mxu0
    %138 = vdwg.mxu0
    %v139 = vadd.f32 %v55, %v131
    %v140 = vadd.f32 %v56, %v136
    %vm141 = vcmask 785408
    %142 = vst.msk [vmem:[#allocation2] sm:$0xff] %vm141, %v139
    %143 = vst.msk [vmem:[#allocation2 + $0x8] sm:$0xff] %vm141, %v140
    // Predicated region
    $region26: #{memory_efficient_attention_forward.3} parent=1 // pred_check
      %p144 = pneg %p42
    $region27: #{memory_efficient_attention_forward.3} parent=1 // pred_check_branch
      %146 = sbr.rel (%p144) target = $region29
    $region28: #{memory_efficient_attention_forward.3} parent=1 // pred_region
      %v147 = vld [vmem:[#allocation2] sm:$0xff]
      %v148 = vld [vmem:[#allocation2 + $0x8] sm:$0xff]
      %v149 = vld [vmem:[%s2] sm:$0x1]
      %v151 = vlaneseq
      %v152 = vshrl.u32 %v151, 7
      %v153 = vsub.s32 0, %v152
      %v154 = vrot.slane %v149, %v153
      %v156 = vadd.f32 %v147, %v154
      %v157 = vadd.f32 %v148, %v154
      %158 = vst.msk [vmem:[%s3] sm:$0xff] %vm141, %v156
      %159 = vst.msk [vmem:[%s3 + $0x8] sm:$0xff] %vm141, %v157
    $region29: #{memory_efficient_attention_forward.3} parent=1 // pred_fallthru
      _
    // Predicated region
    $region30: #{memory_efficient_attention_forward.3} parent=1 // pred_check
      _
    $region31: #{memory_efficient_attention_forward.3} parent=1 // pred_check_branch
      %161 = sbr.rel (0) target = $region33
    $region32: #{memory_efficient_attention_forward.3} parent=1 // pred_region
      _
    $region33: #{memory_efficient_attention_forward.3} parent=1 // pred_fallthru
      _
    // Predicated region
    $region34: #{memory_efficient_attention_forward.3} parent=1 // pred_check
      _
    $region35: #{memory_efficient_attention_forward.3} parent=1 // pred_check_branch
      %163 = sbr.rel (0) target = $region37
    $region36: #{memory_efficient_attention_forward.3} parent=1 // pred_region
      _
    $region37: #{memory_efficient_attention_forward.3} parent=1 // pred_fallthru
      _
    %164 = vsyncpa [#allocation4], 1
    %165 = vsyncpa [#allocation6], 1

// kernel: memory_efficient_attention_forward.4
$region0: #{memory_efficient_attention_forward.4}
  #allocation0 [shape = 'u32[]', space=smem, size = 0x4, offset = 0x4, fixed_abs, tag = 'smem constant byte address 0x4 - core index']
  #allocation1 [shape = 'u32[144,128]{1,0:T(1,128)}', space=vmem, size = 0x12000, scoped, tag = 'internal scratch']
  #allocation2 [shape = 'f32[4,8,1]{2,1,0:T(8,128)}', space=vmem, size = 0x4000, scoped, tag = 'scratch operand']
  #allocation3 [shape = 'f32[4,8,1]{2,1,0:T(8,128)}', space=vmem, size = 0x4000, scoped, tag = 'scratch operand']
  #allocation4 [shape = 'f32[4,8,8]{2,1,0:T(8,128)}', space=vmem, size = 0x4000, scoped, tag = 'scratch operand']
  #allocation5 [shape = 's32[1]{0}', space=sflag, size = 0x4, scoped, tag = 'scoped memory for memory_efficient_attention_forward.4']
  #allocation6 [shape = 's32[1,1]{1,0:T(1,128)S(6)}', space=smem, size = 0x200, scoped, tag = 'prefetched SMEM operand 0']
  %s0 = inlined_call_operand.<no memory space> [shape: s32[1,1], index: 0, kind: input, shape index: {}]
  %s1 = inlined_call_operand.vmem [shape: f32[2,8,32], index: 1, kind: input, shape index: {}]
  %s2 = inlined_call_operand.vmem [shape: f32[2,8,32], index: 2, kind: input, shape index: {}]
  %s3 = inlined_call_operand.vmem [shape: f32[2,8,32], index: 3, kind: input, shape index: {}]
  %s4 = inlined_call_operand.vmem [shape: f32[8,8], index: 4, kind: input, shape index: {}]
  %s5 = inlined_call_operand.vmem [shape: f32[2,8,32], index: 5, kind: output, shape index: {}]
  %s6 = sld [smem:[#allocation0]]
  $region61: #{memory_efficient_attention_forward.4} parent=0
    _
  %s8 = ssub.s32 1, %s6
  %s9 = scalar_select 0, %s8, %s6
  %10 = sst [smem:[#allocation6]] %s0
  loop: start=0, step=1, limit=4
  $region2: #{memory_efficient_attention_forward.4} parent=0 // loop_pre_header
    _
  $region3: #{memory_efficient_attention_forward.4} parent=0 // loop_header
    %s12 = sphi 0, %s16
    %p13 = scmp.ge.s32.totalorder %s12, 4
    %s19 = sphi 0, %s38
    %s20 = sphi 0, %s34
    %s21 = sphi 0, %s30
    %s22 = sphi 0, %s19
    %s23 = sphi 0, %s20
    %s24 = sphi 0, %s21
    %s25 = sphi 0, %s22
    %s26 = sphi 0, %s23
    %s27 = sphi 0, %s24
    %s43 = sphi 0, %s45
    %s46 = sphi 0, %s43
    %s47 = sphi 0, %s46
    %s63 = sphi 0, %s47
    %s71 = sphi 0, %s73
    %s74 = sphi 0, %s71
    %s75 = sphi 0, %s74
    %s91 = sphi 0, %s75
    %s99 = sphi 0, %s101
    %s102 = sphi 0, %s99
    %s103 = sphi 0, %s102
    %s119 = sphi 0, %s103
    %s127 = sphi 0, %s129
    %s130 = sphi 0, %s127
    %s131 = sphi 0, %s130
    %s147 = sphi 0, %s131
    %s155 = sphi 0, %s157
    %s158 = sphi 0, %s155
    %s159 = sphi 0, %s158
    %s175 = sphi 0, %s159
  $region4: #{memory_efficient_attention_forward.4} parent=0 // loop_header_branch
    %15 = sbr.rel (%p13) target = $region8
  $region5: #{memory_efficient_attention_forward.4} parent=0 // loop_body
    %s17 = ssub.s32 %s12, 1
    %s18 = ssub.s32 %s12, 2
    %s28 = sadd.s32 1, %s21
    %p29 = scmp.ge.s32.totalorder %s28, 1
    %s30 = scalar_select %p29, 0, %s28
    %s31 = sadd.s32 1, %s20
    %s32 = scalar_select %p29, %s31, %s20
    %p33 = scmp.ge.s32.totalorder %s32, 1
    %s34 = scalar_select %p33, 0, %s32
    %s35 = sadd.s32 1, %s19
    %s36 = scalar_select %p33, %s35, %s19
    %p37 = scmp.ge.s32.totalorder %s36, 2
    %s38 = scalar_select %p37, 0, %s36
    %s39 = ssub.s32 %s19, %s38
    %s40 = ssub.s32 %s20, %s34
    %s41 = sor.u32 %s39, %s40
    %p42 = scmp.eq.s32.totalorder %s41, 0
    %s44 = sadd.s32 %s43, 1
    %s45 = scalar_select %p42, %s43, %s44
    %p48 = pneg %p42
    %p49 = scmp.eq.s32.totalorder %s12, 1
    %p50 = por %p48, %p49
    %p51 = scmp.ne.s32.totalorder %s43, %s46
    %p52 = scmp.eq.s32.totalorder %s12, 0
    %p53 = por %p51, %p52
    %p54 = scmp.ne.s32.totalorder %s43, %s46
    %p55 = scmp.eq.s32.totalorder %s17, 1
    %p56 = por %p54, %p55
    %p57 = scmp.ne.s32.totalorder %s46, %s47
    %p58 = scmp.eq.s32.totalorder %s17, 0
    %p59 = por %p57, %p58
    %p60 = scmp.ne.s32.totalorder %s46, %s47
    %p61 = scmp.eq.s32.totalorder %s18, 1
    %p62 = por %p60, %p61
    %p64 = scmp.ne.s32.totalorder %s47, %s63
    %p65 = scmp.eq.s32.totalorder %s18, 0
    %p66 = por %p64, %p65
    %s67 = ssub.s32 %s19, %s38
    %s68 = ssub.s32 %s21, %s30
    %s69 = sor.u32 %s67, %s68
    %p70 = scmp.eq.s32.totalorder %s69, 0
    %s72 = sadd.s32 %s71, 1
    %s73 = scalar_select %p70, %s71, %s72
    %p76 = pneg %p70
    %p77 = scmp.eq.s32.totalorder %s12, 1
    %p78 = por %p76, %p77
    %p79 = scmp.ne.s32.totalorder %s71, %s74
    %p80 = scmp.eq.s32.totalorder %s12, 0
    %p81 = por %p79, %p80
    %p82 = scmp.ne.s32.totalorder %s71, %s74
    %p83 = scmp.eq.s32.totalorder %s17, 1
    %p84 = por %p82, %p83
    %p85 = scmp.ne.s32.totalorder %s74, %s75
    %p86 = scmp.eq.s32.totalorder %s17, 0
    %p87 = por %p85, %p86
    %p88 = scmp.ne.s32.totalorder %s74, %s75
    %p89 = scmp.eq.s32.totalorder %s18, 1
    %p90 = por %p88, %p89
    %p92 = scmp.ne.s32.totalorder %s75, %s91
    %p93 = scmp.eq.s32.totalorder %s18, 0
    %p94 = por %p92, %p93
    %s95 = ssub.s32 %s19, %s38
    %s96 = ssub.s32 %s21, %s30
    %s97 = sor.u32 %s95, %s96
    %p98 = scmp.eq.s32.totalorder %s97, 0
    %s100 = sadd.s32 %s99, 1
    %s101 = scalar_select %p98, %s99, %s100
    %p104 = pneg %p98
    %p105 = scmp.eq.s32.totalorder %s12, 1
    %p106 = por %p104, %p105
    %p107 = scmp.ne.s32.totalorder %s99, %s102
    %p108 = scmp.eq.s32.totalorder %s12, 0
    %p109 = por %p107, %p108
    %p110 = scmp.ne.s32.totalorder %s99, %s102
    %p111 = scmp.eq.s32.totalorder %s17, 1
    %p112 = por %p110, %p111
    %p113 = scmp.ne.s32.totalorder %s102, %s103
    %p114 = scmp.eq.s32.totalorder %s17, 0
    %p115 = por %p113, %p114
    %p116 = scmp.ne.s32.totalorder %s102, %s103
    %p117 = scmp.eq.s32.totalorder %s18, 1
    %p118 = por %p116, %p117
    %p120 = scmp.ne.s32.totalorder %s103, %s119
    %p121 = scmp.eq.s32.totalorder %s18, 0
    %p122 = por %p120, %p121
    %s123 = ssub.s32 %s20, %s34
    %s124 = ssub.s32 %s21, %s30
    %s125 = sor.u32 %s123, %s124
    %p126 = scmp.eq.s32.totalorder %s125, 0
    %s128 = sadd.s32 %s127, 1
    %s129 = scalar_select %p126, %s127, %s128
    %p132 = pneg %p126
    %p133 = scmp.eq.s32.totalorder %s12, 1
    %p134 = por %p132, %p133
    %p135 = scmp.ne.s32.totalorder %s127, %s130
    %p136 = scmp.eq.s32.totalorder %s12, 0
    %p137 = por %p135, %p136
    %p138 = scmp.ne.s32.totalorder %s127, %s130
    %p139 = scmp.eq.s32.totalorder %s17, 1
    %p140 = por %p138, %p139
    %p141 = scmp.ne.s32.totalorder %s130, %s131
    %p142 = scmp.eq.s32.totalorder %s17, 0
    %p143 = por %p141, %p142
    %p144 = scmp.ne.s32.totalorder %s130, %s131
    %p145 = scmp.eq.s32.totalorder %s18, 1
    %p146 = por %p144, %p145
    %p148 = scmp.ne.s32.totalorder %s131, %s147
    %p149 = scmp.eq.s32.totalorder %s18, 0
    %p150 = por %p148, %p149
    %s151 = ssub.s32 %s19, %s38
    %s152 = ssub.s32 %s20, %s34
    %s153 = sor.u32 %s151, %s152
    %p154 = scmp.eq.s32.totalorder %s153, 0
    %s156 = sadd.s32 %s155, 1
    %s157 = scalar_select %p154, %s155, %s156
    %p160 = pneg %p154
    %p161 = scmp.eq.s32.totalorder %s12, 1
    %p162 = por %p160, %p161
    %p163 = scmp.ne.s32.totalorder %s155, %s158
    %p164 = scmp.eq.s32.totalorder %s12, 0
    %p165 = por %p163, %p164
    %p166 = scmp.ne.s32.totalorder %s155, %s158
    %p167 = scmp.eq.s32.totalorder %s17, 1
    %p168 = por %p166, %p167
    %p169 = scmp.ne.s32.totalorder %s158, %s159
    %p170 = scmp.eq.s32.totalorder %s17, 0
    %p171 = por %p169, %p170
    %p172 = scmp.ne.s32.totalorder %s158, %s159
    %p173 = scmp.eq.s32.totalorder %s18, 1
    %p174 = por %p172, %p173
    %p176 = scmp.ne.s32.totalorder %s159, %s175
    %p177 = scmp.eq.s32.totalorder %s18, 0
    %p178 = por %p176, %p177
    %p179 = scmp.le.s32.totalorder 1, %s12
    %p180 = scmp.lt.s32.totalorder %s12, 3
    %p181 = pnand %p179, %p180
    %p182 = pneg %p181
    // Predicated region
    $region9: #{memory_efficient_attention_forward.4} parent=5 // pred_check
      _
    $region10: #{memory_efficient_attention_forward.4} parent=5 // pred_check_branch
      %184 = sbr.rel (%p181) target = $region12
    $region11: #{memory_efficient_attention_forward.4} parent=5 // pred_region
      %s185 = ssub.s32 %s12, 1
      // Predicated region
      $region13: #{memory_efficient_attention_forward.4} parent=11 // pred_check
        %p186 = pneg %p143
      $region14: #{memory_efficient_attention_forward.4} parent=11 // pred_check_branch
        %188 = sbr.rel (%p186) target = $region16
      $region15: #{memory_efficient_attention_forward.4} parent=11 // pred_region
        %p189 = scmp.lt.s32.totalorder %s23, 0
        %s190 = scalar_select %p189, %s23, 0
        %p191 = scmp.lt.s32.totalorder %s24, 0
        %s192 = scalar_select %p191, %s24, 0
        %s193 = sadd.s32 %s192, %s190
        %s194 = smul.addr %s193, 8
        %s195 = scalar_lea.vmem %s4, %s194
      $region16: #{memory_efficient_attention_forward.4} parent=11 // pred_fallthru
        _
    $region12: #{memory_efficient_attention_forward.4} parent=5 // pred_fallthru
      _
    %p196 = scmp.lt.s32.totalorder %s12, 2
    // Predicated region
    $region17: #{memory_efficient_attention_forward.4} parent=5 // pred_check
      %p197 = pneg %p196
    $region18: #{memory_efficient_attention_forward.4} parent=5 // pred_check_branch
      %199 = sbr.rel (%p197) target = $region20
    $region19: #{memory_efficient_attention_forward.4} parent=5 // pred_region
      // Predicated region
      $region21: #{memory_efficient_attention_forward.4} parent=19 // pred_check
        %p200 = pneg %p53
      $region22: #{memory_efficient_attention_forward.4} parent=19 // pred_check_branch
        %202 = sbr.rel (%p200) target = $region24
      $region23: #{memory_efficient_attention_forward.4} parent=19 // pred_region
        %p203 = scmp.lt.s32.totalorder %s19, 1
        %s204 = scalar_select %p203, %s19, 1
        %p205 = scmp.lt.s32.totalorder %s20, 0
        %s206 = scalar_select %p205, %s20, 0
        %s207 = sadd.s32 %s206, %s204
        %s208 = smul.addr %s207, 8
        %s209 = scalar_lea.vmem %s1, %s208
      $region24: #{memory_efficient_attention_forward.4} parent=19 // pred_fallthru
        _
      // Predicated region
      $region25: #{memory_efficient_attention_forward.4} parent=19 // pred_check
        %p210 = pneg %p81
      $region26: #{memory_efficient_attention_forward.4} parent=19 // pred_check_branch
        %212 = sbr.rel (%p210) target = $region28
      $region27: #{memory_efficient_attention_forward.4} parent=19 // pred_region
        %p213 = scmp.lt.s32.totalorder %s19, 1
        %s214 = scalar_select %p213, %s19, 1
        %p215 = scmp.lt.s32.totalorder %s21, 0
        %s216 = scalar_select %p215, %s21, 0
        %s217 = sadd.s32 %s216, %s214
        %s218 = smul.addr %s217, 8
        %s219 = scalar_lea.vmem %s2, %s218
      $region28: #{memory_efficient_attention_forward.4} parent=19 // pred_fallthru
        _
      // Predicated region
      $region29: #{memory_efficient_attention_forward.4} parent=19 // pred_check
        %p220 = pneg %p109
      $region30: #{memory_efficient_attention_forward.4} parent=19 // pred_check_branch
        %222 = sbr.rel (%p220) target = $region32
      $region31: #{memory_efficient_attention_forward.4} parent=19 // pred_region
        %p223 = scmp.lt.s32.totalorder %s19, 1
        %s224 = scalar_select %p223, %s19, 1
        %p225 = scmp.lt.s32.totalorder %s21, 0
        %s226 = scalar_select %p225, %s21, 0
        %s227 = sadd.s32 %s226, %s224
        %s228 = smul.addr %s227, 8
        %s229 = scalar_lea.vmem %s3, %s228
      $region32: #{memory_efficient_attention_forward.4} parent=19 // pred_fallthru
        _
    $region20: #{memory_efficient_attention_forward.4} parent=5 // pred_fallthru
      _
    %p230 = scmp.le.s32.totalorder 1, %s12
    %p231 = scmp.lt.s32.totalorder %s12, 3
    %p232 = pnand %p230, %p231
    %p233 = pneg %p232
    // Predicated region
    $region33: #{memory_efficient_attention_forward.4} parent=5 // pred_check
      _
    $region34: #{memory_efficient_attention_forward.4} parent=5 // pred_check_branch
      %235 = sbr.rel (%p232) target = $region36
    $region35: #{memory_efficient_attention_forward.4} parent=5 // pred_region
      %s236 = ssub.s32 %s12, 1
      %p237 = scmp.lt.s32.totalorder %s22, 1
      %s238 = scalar_select %p237, %s22, 1
      %p239 = scmp.lt.s32.totalorder %s23, 0
      %s240 = scalar_select %p239, %s23, 0
      %s241 = sadd.s32 %s240, %s238
      %s242 = smul.addr %s241, 8
      %s243 = scalar_lea.vmem %s1, %s242
      %p244 = pneg %p59
      %p245 = pneg %p56
      %p246 = scmp.lt.s32.totalorder %s22, 1
      %s247 = scalar_select %p246, %s22, 1
      %p248 = scmp.lt.s32.totalorder %s24, 0
      %s249 = scalar_select %p248, %s24, 0
      %s250 = sadd.s32 %s249, %s247
      %s251 = smul.addr %s250, 8
      %s252 = scalar_lea.vmem %s2, %s251
      %p253 = pneg %p87
      %p254 = pneg %p84
      %p255 = scmp.lt.s32.totalorder %s22, 1
      %s256 = scalar_select %p255, %s22, 1
      %p257 = scmp.lt.s32.totalorder %s24, 0
      %s258 = scalar_select %p257, %s24, 0
      %s259 = sadd.s32 %s258, %s256
      %s260 = smul.addr %s259, 8
      %s261 = scalar_lea.vmem %s3, %s260
      %p262 = pneg %p115
      %p263 = pneg %p112
      %p264 = scmp.lt.s32.totalorder %s23, 0
      %s265 = scalar_select %p264, %s23, 0
      %p266 = scmp.lt.s32.totalorder %s24, 0
      %s267 = scalar_select %p266, %s24, 0
      %s268 = sadd.s32 %s267, %s265
      %s269 = smul.addr %s268, 8
      %s270 = scalar_lea.vmem %s4, %s269
      %p271 = pneg %p143
      %p272 = pneg %p140
      %p273 = pneg %p171
      %p274 = pneg %p168
      %p275 = scmp.lt.s32.totalorder %s22, 1
      %s276 = scalar_select %p275, %s22, 1
      %p277 = scmp.lt.s32.totalorder %s23, 0
      %s278 = scalar_select %p277, %s23, 0
      %s279 = sadd.s32 %s278, %s276
      %s280 = smul.addr %s279, 8
      %s281 = scalar_lea.vmem %s5, %s280
      %p282 = scmp.lt.s32.totalorder %s22, 1
      %s283 = scalar_select %p282, %s22, 1
      %p284 = scmp.lt.s32.totalorder %s23, 0
      %s285 = scalar_select %p284, %s23, 0
      %s286 = sadd.s32 %s285, %s283
      %s287 = smul.addr %s286, 8
      %s288 = scalar_lea.vmem %s1, %s287
      %p289 = scmp.lt.s32.totalorder %s22, 1
      %s290 = scalar_select %p289, %s22, 1
      %p291 = scmp.lt.s32.totalorder %s24, 0
      %s292 = scalar_select %p291, %s24, 0
      %s293 = sadd.s32 %s292, %s290
      %s294 = smul.addr %s293, 8
      %s295 = scalar_lea.vmem %s2, %s294
      %p296 = scmp.lt.s32.totalorder %s22, 1
      %s297 = scalar_select %p296, %s22, 1
      %p298 = scmp.lt.s32.totalorder %s24, 0
      %s299 = scalar_select %p298, %s24, 0
      %s300 = sadd.s32 %s299, %s297
      %s301 = smul.addr %s300, 8
      %s302 = scalar_lea.vmem %s3, %s301
      %p303 = scmp.lt.s32.totalorder %s23, 0
      %s304 = scalar_select %p303, %s23, 0
      %p305 = scmp.lt.s32.totalorder %s24, 0
      %s306 = scalar_select %p305, %s24, 0
      %s307 = sadd.s32 %s306, %s304
      %s308 = smul.addr %s307, 8
      %s309 = scalar_lea.vmem %s4, %s308
      %p310 = scmp.lt.s32.totalorder %s22, 1
      %s311 = scalar_select %p310, %s22, 1
      %p312 = scmp.lt.s32.totalorder %s23, 0
      %s313 = scalar_select %p312, %s23, 0
      %s314 = sadd.s32 %s313, %s311
      %s315 = smul.addr %s314, 8
      %s316 = scalar_lea.vmem %s5, %s315
      %p317 = scmp.eq.s32.totalorder %s24, 0
      // Predicated region
      $region37: #{memory_efficient_attention_forward.4} parent=35 // pred_check
        %p318 = pneg %p317
      $region38: #{memory_efficient_attention_forward.4} parent=35 // pred_check_branch
        %320 = sbr.rel (%p318) target = $region40
      $region39: #{memory_efficient_attention_forward.4} parent=35 // pred_region
        %vm321 = vcmask 7168
        %322 = vst.msk [vmem:[#allocation2] sm:$0xff] %vm321, -inf
        %323 = vst.msk [vmem:[#allocation2 + $0x8] sm:$0xff] %vm321, -inf
        %324 = vst.msk [vmem:[#allocation2 + $0x10] sm:$0xff] %vm321, -inf
        %325 = vst.msk [vmem:[#allocation2 + $0x18] sm:$0xff] %vm321, -inf
        %326 = vst.msk [vmem:[#allocation3] sm:$0xff] %vm321, 0.0
        %327 = vst.msk [vmem:[#allocation3 + $0x8] sm:$0xff] %vm321, 0.0
        %328 = vst.msk [vmem:[#allocation3 + $0x10] sm:$0xff] %vm321, 0.0
        %329 = vst.msk [vmem:[#allocation3 + $0x18] sm:$0xff] %vm321, 0.0
        %vm330 = vcmask 64512
        %331 = vst.msk [vmem:[#allocation4] sm:$0xff] %vm330, 0.0
        %332 = vst.msk [vmem:[#allocation4 + $0x8] sm:$0xff] %vm330, 0.0
        %333 = vst.msk [vmem:[#allocation4 + $0x10] sm:$0xff] %vm330, 0.0
        %334 = vst.msk [vmem:[#allocation4 + $0x18] sm:$0xff] %vm330, 0.0
      $region40: #{memory_efficient_attention_forward.4} parent=35 // pred_fallthru
        _
      %s335 = sshra.s32 %s24, 7
      %s336 = sand.u32 %s24, 127
      %s337 = sadd.s32 %s335, %s23
      %s338 = smul.u32 %s337, 128
      %s339 = sshra.s32 %s24, 7
      %s340 = sand.u32 %s24, 127
      %s341 = sadd.s32 %s338, %s340
      %s342 = sld [smem:[#allocation6 + %s341]]
      %p343 = scmp.gt.s32.totalorder %s342, 0
      // Predicated region
      $region41: #{memory_efficient_attention_forward.4} parent=35 // pred_check
        %p344 = pneg %p343
      $region42: #{memory_efficient_attention_forward.4} parent=35 // pred_check_branch
        %346 = sbr.rel (%p344) target = $region44
      $region43: #{memory_efficient_attention_forward.4} parent=35 // pred_region
        %v347 = vld [vmem:[%s288] sm:$0xff]
        %v348 = vld [vmem:[%s295] sm:$0xff]
        %v349 = vld [vmem:[%s302] sm:$0xff]
        %v350 = vld [vmem:[%s309] sm:$0xff]
        %vm351 = vcmask 64512
        %v353 = vsel %vm351, %v347, 0
        %v356 = vsel %vm351, %v348, 0
        %358 = vmatprep.subr.mxu0 0.0
        %359 = vmatpush1.xpose.msra.mxu0 0.0
        %360 = vmatprep.subr.mxu0 0.0
        %361 = vmatpush1.xpose.msra.mxu0 0.0
        %362 = vmatprep.subr.mxu0 0.0
        %363 = vmatpush1.xpose.msra.mxu0 0.0
        %364 = vmatprep.subr.mxu0 0.0
        %365 = vmatpush1.xpose.msra.mxu0 0.0
        %366 = vmatprep.subr.mxu0 0.0
        %367 = vmatpush1.xpose.msra.mxu0 0.0
        %368 = vmatprep.subr.mxu0 0.0
        %369 = vmatpush1.xpose.msra.mxu0 0.0
        %370 = vmatprep.subr.mxu0 0.0
        %371 = vmatpush1.xpose.msra.mxu0 0.0
        %372 = vmatprep.subr.mxu0 0.0
        %373 = vmatpush1.xpose.msra.mxu0 0.0
        %374 = vmatprep.subr.mxu0 0.0
        %375 = vmatpush1.xpose.msra.mxu0 0.0
        %376 = vmatprep.subr.mxu0 0.0
        %377 = vmatpush1.xpose.msra.mxu0 0.0
        %378 = vmatprep.subr.mxu0 0.0
        %379 = vmatpush1.xpose.msra.mxu0 0.0
        %380 = vmatprep.subr.mxu0 0.0
        %381 = vmatpush1.xpose.msra.mxu0 0.0
        %382 = vmatprep.subr.mxu0 0.0
        %383 = vmatpush1.xpose.msra.mxu0 0.0
        %384 = vmatprep.subr.mxu0 0.0
        %385 = vmatpush1.xpose.msra.mxu0 0.0
        %386 = vmatprep.subr.mxu0 0.0
        %387 = vmatpush1.xpose.msra.mxu0 0.0
        %388 = vmatprep.subr.mxu0 0.0
        %389 = vmatpush1.xpose.msra.mxu0 %v356
        %390 = vmatprep.subr.mxu0 0.0
        %391 = vmatpush2.xpose.msra.mxu0 0.0
        %392 = vmatprep.subr.mxu0 0.0
        %393 = vmatpush2.xpose.msra.mxu0 0.0
        %394 = vmatprep.subr.mxu0 0.0
        %395 = vmatpush2.xpose.msra.mxu0 0.0
        %396 = vmatprep.subr.mxu0 0.0
        %397 = vmatpush2.xpose.msra.mxu0 0.0
        %398 = vmatprep.subr.mxu0 0.0
        %399 = vmatpush2.xpose.msra.mxu0 0.0
        %400 = vmatprep.subr.mxu0 0.0
        %401 = vmatpush2.xpose.msra.mxu0 0.0
        %402 = vmatprep.subr.mxu0 0.0
        %403 = vmatpush2.xpose.msra.mxu0 0.0
        %404 = vmatprep.subr.mxu0 0.0
        %405 = vmatpush2.xpose.msra.mxu0 0.0
        %406 = vmatprep.subr.mxu0 0.0
        %407 = vmatpush2.xpose.msra.mxu0 0.0
        %408 = vmatprep.subr.mxu0 0.0
        %409 = vmatpush2.xpose.msra.mxu0 0.0
        %410 = vmatprep.subr.mxu0 0.0
        %411 = vmatpush2.xpose.msra.mxu0 0.0
        %412 = vmatprep.subr.mxu0 0.0
        %413 = vmatpush2.xpose.msra.mxu0 0.0
        %414 = vmatprep.subr.mxu0 0.0
        %415 = vmatpush2.xpose.msra.mxu0 0.0
        %416 = vmatprep.subr.mxu0 0.0
        %417 = vmatpush2.xpose.msra.mxu0 0.0
        %418 = vmatprep.subr.mxu0 0.0
        %419 = vmatpush2.xpose.msra.mxu0 0.0
        %420 = vmatprep.subr.mxu0 0.0
        %421 = vmatpush2.xpose.msra.mxu0 0.0
        %422 = vmatprep.mubr.f32.mxu0 0.0
        %423 = vmatmul.mubr.f32.gmra.mxu0 %v353
        %v424 = vpop.f32.mrf.mxu0
        %v425 = vadd.f32 %v350, %v424
        %v426 = vpop.f32.mrf.mxu0
        %427 = vdwg.mxu0
        %v428 = vld [vmem:[#allocation2] sm:$0xff]
        %v429 = vsel %vm351, %v425, -inf
        %430 = vmax.xlane.f32.xlu0 %v429
        %v431 = vpop.xlane.xlu0 %430
        %v432 = vmax.f32 %v428, %v431
        %v433 = vsub.f32 %v428, %v432
        %v434 = vmul.f32 %v433, 1.442695
        %v435 = vpow.pop %v434
        %437 = vset.pattern.permute.xlu0 0
        %438 = vperm.xlu0 %437, %v432
        %v439 = vpop.permute.xlu0 %438
        %v441 = vsub.f32 %v425, %v439
        %v442 = vmul.f32 %v441, 1.442695
        %v443 = vpow.pop %v442
        %v444 = vld [vmem:[#allocation3] sm:$0xff]
        %v445 = vmul.f32 %v435, %v444
        %v446 = vsel %vm351, %v443, 0.0
        %447 = vadd.xlane.f32.xlu0 %v446
        %v448 = vpop.xlane.xlu0 %447
        %v449 = vadd.f32 %v445, %v448
        %vm450 = vcmask 7168
        %451 = vst.msk [vmem:[#allocation3] sm:$0xff] %vm450, %v449
        %v452 = vld [vmem:[#allocation4] sm:$0xff]
        %454 = vset.pattern.permute.xlu0 0
        %455 = vperm.xlu0 %454, %v435
        %v456 = vpop.permute.xlu0 %455
        %v458 = vmul.f32 %v456, %v452
        %v460 = vsel %vm351, %v443, 0
        %462 = vmatprep.subr.mxu0 0.0
        %463 = vmatpush1.msra.mxu0 0.0
        %464 = vmatprep.subr.mxu0 0.0
        %465 = vmatpush1.msra.mxu0 0.0
        %466 = vmatprep.subr.mxu0 0.0
        %467 = vmatpush1.msra.mxu0 0.0
        %468 = vmatprep.subr.mxu0 0.0
        %469 = vmatpush1.msra.mxu0 0.0
        %470 = vmatprep.subr.mxu0 0.0
        %471 = vmatpush1.msra.mxu0 0.0
        %472 = vmatprep.subr.mxu0 0.0
        %473 = vmatpush1.msra.mxu0 0.0
        %474 = vmatprep.subr.mxu0 0.0
        %475 = vmatpush1.msra.mxu0 0.0
        %476 = vmatprep.subr.mxu0 0.0
        %477 = vmatpush1.msra.mxu0 0.0
        %478 = vmatprep.subr.mxu0 0.0
        %479 = vmatpush1.msra.mxu0 0.0
        %480 = vmatprep.subr.mxu0 0.0
        %481 = vmatpush1.msra.mxu0 0.0
        %482 = vmatprep.subr.mxu0 0.0
        %483 = vmatpush1.msra.mxu0 0.0
        %484 = vmatprep.subr.mxu0 0.0
        %485 = vmatpush1.msra.mxu0 0.0
        %486 = vmatprep.subr.mxu0 0.0
        %487 = vmatpush1.msra.mxu0 0.0
        %488 = vmatprep.subr.mxu0 0.0
        %489 = vmatpush1.msra.mxu0 0.0
        %490 = vmatprep.subr.mxu0 0.0
        %491 = vmatpush1.msra.mxu0 0.0
        %492 = vmatprep.subr.mxu0 0.0
        %493 = vmatpush1.msra.mxu0 %v349
        %494 = vmatprep.subr.mxu0 0.0
        %495 = vmatpush2.msra.mxu0 0.0
        %496 = vmatprep.subr.mxu0 0.0
        %497 = vmatpush2.msra.mxu0 0.0
        %498 = vmatprep.subr.mxu0 0.0
        %499 = vmatpush2.msra.mxu0 0.0
        %500 = vmatprep.subr.mxu0 0.0
        %501 = vmatpush2.msra.mxu0 0.0
        %502 = vmatprep.subr.mxu0 0.0
        %503 = vmatpush2.msra.mxu0 0.0
        %504 = vmatprep.subr.mxu0 0.0
        %505 = vmatpush2.msra.mxu0 0.0
        %506 = vmatprep.subr.mxu0 0.0
        %507 = vmatpush2.msra.mxu0 0.0
        %508 = vmatprep.subr.mxu0 0.0
        %509 = vmatpush2.msra.mxu0 0.0
        %510 = vmatprep.subr.mxu0 0.0
        %511 = vmatpush2.msra.mxu0 0.0
        %512 = vmatprep.subr.mxu0 0.0
        %513 = vmatpush2.msra.mxu0 0.0
        %514 = vmatprep.subr.mxu0 0.0
        %515 = vmatpush2.msra.mxu0 0.0
        %516 = vmatprep.subr.mxu0 0.0
        %517 = vmatpush2.msra.mxu0 0.0
        %518 = vmatprep.subr.mxu0 0.0
        %519 = vmatpush2.msra.mxu0 0.0
        %520 = vmatprep.subr.mxu0 0.0
        %521 = vmatpush2.msra.mxu0 0.0
        %522 = vmatprep.subr.mxu0 0.0
        %523 = vmatpush2.msra.mxu0 0.0
        %524 = vmatprep.subr.mxu0 0.0
        %525 = vmatpush2.msra.mxu0 0.0
        %526 = vmatprep.mubr.f32.mxu0 0.0
        %527 = vmatmul.mubr.f32.gmra.mxu0 %v460
        %v528 = vpop.f32.mrf.mxu0
        %v529 = vadd.f32 0.0, %v528
        %v530 = vpop.f32.mrf.mxu0
        %531 = vdwg.mxu0
        %v532 = vadd.f32 %v458, %v529
        %533 = vst.msk [vmem:[#allocation4] sm:$0xff] %vm351, %v532
        %534 = vst.msk [vmem:[#allocation2] sm:$0xff] %vm450, %v432
        %535 = vrot.lane.b32.xlu0 %v347, 120
        %v536 = vpop.permute.xlu0 %535
        %537 = vrot.lane.b32.xlu0 %v348, 120
        %v538 = vpop.permute.xlu0 %537
        %v539 = vsel %vm351, %v536, 0
        %v541 = vsel %vm351, %v538, 0
        %543 = vmatprep.subr.mxu0 0.0
        %544 = vmatpush1.xpose.msra.mxu0 0.0
        %545 = vmatprep.subr.mxu0 0.0
        %546 = vmatpush1.xpose.msra.mxu0 0.0
        %547 = vmatprep.subr.mxu0 0.0
        %548 = vmatpush1.xpose.msra.mxu0 0.0
        %549 = vmatprep.subr.mxu0 0.0
        %550 = vmatpush1.xpose.msra.mxu0 0.0
        %551 = vmatprep.subr.mxu0 0.0
        %552 = vmatpush1.xpose.msra.mxu0 0.0
        %553 = vmatprep.subr.mxu0 0.0
        %554 = vmatpush1.xpose.msra.mxu0 0.0
        %555 = vmatprep.subr.mxu0 0.0
        %556 = vmatpush1.xpose.msra.mxu0 0.0
        %557 = vmatprep.subr.mxu0 0.0
        %558 = vmatpush1.xpose.msra.mxu0 0.0
        %559 = vmatprep.subr.mxu0 0.0
        %560 = vmatpush1.xpose.msra.mxu0 0.0
        %561 = vmatprep.subr.mxu0 0.0
        %562 = vmatpush1.xpose.msra.mxu0 0.0
        %563 = vmatprep.subr.mxu0 0.0
        %564 = vmatpush1.xpose.msra.mxu0 0.0
        %565 = vmatprep.subr.mxu0 0.0
        %566 = vmatpush1.xpose.msra.mxu0 0.0
        %567 = vmatprep.subr.mxu0 0.0
        %568 = vmatpush1.xpose.msra.mxu0 0.0
        %569 = vmatprep.subr.mxu0 0.0
        %570 = vmatpush1.xpose.msra.mxu0 0.0
        %571 = vmatprep.subr.mxu0 0.0
        %572 = vmatpush1.xpose.msra.mxu0 0.0
        %573 = vmatprep.subr.mxu0 0.0
        %574 = vmatpush1.xpose.msra.mxu0 %v541
        %575 = vmatprep.subr.mxu0 0.0
        %576 = vmatpush2.xpose.msra.mxu0 0.0
        %577 = vmatprep.subr.mxu0 0.0
        %578 = vmatpush2.xpose.msra.mxu0 0.0
        %579 = vmatprep.subr.mxu0 0.0
        %580 = vmatpush2.xpose.msra.mxu0 0.0
        %581 = vmatprep.subr.mxu0 0.0
        %582 = vmatpush2.xpose.msra.mxu0 0.0
        %583 = vmatprep.subr.mxu0 0.0
        %584 = vmatpush2.xpose.msra.mxu0 0.0
        %585 = vmatprep.subr.mxu0 0.0
        %586 = vmatpush2.xpose.msra.mxu0 0.0
        %587 = vmatprep.subr.mxu0 0.0
        %588 = vmatpush2.xpose.msra.mxu0 0.0
        %589 = vmatprep.subr.mxu0 0.0
        %590 = vmatpush2.xpose.msra.mxu0 0.0
        %591 = vmatprep.subr.mxu0 0.0
        %592 = vmatpush2.xpose.msra.mxu0 0.0
        %593 = vmatprep.subr.mxu0 0.0
        %594 = vmatpush2.xpose.msra.mxu0 0.0
        %595 = vmatprep.subr.mxu0 0.0
        %596 = vmatpush2.xpose.msra.mxu0 0.0
        %597 = vmatprep.subr.mxu0 0.0
        %598 = vmatpush2.xpose.msra.mxu0 0.0
        %599 = vmatprep.subr.mxu0 0.0
        %600 = vmatpush2.xpose.msra.mxu0 0.0
        %601 = vmatprep.subr.mxu0 0.0
        %602 = vmatpush2.xpose.msra.mxu0 0.0
        %603 = vmatprep.subr.mxu0 0.0
        %604 = vmatpush2.xpose.msra.mxu0 0.0
        %605 = vmatprep.subr.mxu0 0.0
        %606 = vmatpush2.xpose.msra.mxu0 0.0
        %607 = vmatprep.mubr.f32.mxu0 0.0
        %608 = vmatmul.mubr.f32.gmra.mxu0 %v539
        %v609 = vpop.f32.mrf.mxu0
        %v610 = vadd.f32 %v350, %v609
        %v611 = vpop.f32.mrf.mxu0
        %612 = vdwg.mxu0
        %s613 = scalar_lea.vmem [#allocation2], 8
        %v614 = vld [vmem:[%s613] sm:$0xff]
        %v615 = vsel %vm351, %v610, -inf
        %616 = vmax.xlane.f32.xlu0 %v615
        %v617 = vpop.xlane.xlu0 %616
        %v618 = vmax.f32 %v614, %v617
        %v619 = vsub.f32 %v614, %v618
        %v620 = vmul.f32 %v619, 1.442695
        %v621 = vpow.pop %v620
        %623 = vset.pattern.permute.xlu0 0
        %624 = vperm.xlu0 %623, %v618
        %v625 = vpop.permute.xlu0 %624
        %v627 = vsub.f32 %v610, %v625
        %v628 = vmul.f32 %v627, 1.442695
        %v629 = vpow.pop %v628
        %s630 = scalar_lea.vmem [#allocation3], 8
        %v631 = vld [vmem:[%s630] sm:$0xff]
        %v632 = vmul.f32 %v621, %v631
        %v633 = vsel %vm351, %v629, 0.0
        %634 = vadd.xlane.f32.xlu0 %v633
        %v635 = vpop.xlane.xlu0 %634
        %v636 = vadd.f32 %v632, %v635
        %637 = vst.msk [vmem:[%s630] sm:$0xff] %vm450, %v636
        %s638 = scalar_lea.vmem [#allocation4], 8
        %v639 = vld [vmem:[%s638] sm:$0xff]
        %641 = vset.pattern.permute.xlu0 0
        %642 = vperm.xlu0 %641, %v621
        %v643 = vpop.permute.xlu0 %642
        %v645 = vmul.f32 %v643, %v639
        %647 = vrot.lane.b32.xlu0 %v349, 120
        %v648 = vpop.permute.xlu0 %647
        %v651 = vsel %vm351, %v629, 0
        %653 = vmatprep.subr.mxu0 0.0
        %654 = vmatpush1.msra.mxu0 0.0
        %655 = vmatprep.subr.mxu0 0.0
        %656 = vmatpush1.msra.mxu0 0.0
        %657 = vmatprep.subr.mxu0 0.0
        %658 = vmatpush1.msra.mxu0 0.0
        %659 = vmatprep.subr.mxu0 0.0
        %660 = vmatpush1.msra.mxu0 0.0
        %661 = vmatprep.subr.mxu0 0.0
        %662 = vmatpush1.msra.mxu0 0.0
        %663 = vmatprep.subr.mxu0 0.0
        %664 = vmatpush1.msra.mxu0 0.0
        %665 = vmatprep.subr.mxu0 0.0
        %666 = vmatpush1.msra.mxu0 0.0
        %667 = vmatprep.subr.mxu0 0.0
        %668 = vmatpush1.msra.mxu0 0.0
        %669 = vmatprep.subr.mxu0 0.0
        %670 = vmatpush1.msra.mxu0 0.0
        %671 = vmatprep.subr.mxu0 0.0
        %672 = vmatpush1.msra.mxu0 0.0
        %673 = vmatprep.subr.mxu0 0.0
        %674 = vmatpush1.msra.mxu0 0.0
        %675 = vmatprep.subr.mxu0 0.0
        %676 = vmatpush1.msra.mxu0 0.0
        %677 = vmatprep.subr.mxu0 0.0
        %678 = vmatpush1.msra.mxu0 0.0
        %679 = vmatprep.subr.mxu0 0.0
        %680 = vmatpush1.msra.mxu0 0.0
        %681 = vmatprep.subr.mxu0 0.0
        %682 = vmatpush1.msra.mxu0 0.0
        %683 = vmatprep.subr.mxu0 0.0
        %684 = vmatpush1.msra.mxu0 %v648
        %685 = vmatprep.subr.mxu0 0.0
        %686 = vmatpush2.msra.mxu0 0.0
        %687 = vmatprep.subr.mxu0 0.0
        %688 = vmatpush2.msra.mxu0 0.0
        %689 = vmatprep.subr.mxu0 0.0
        %690 = vmatpush2.msra.mxu0 0.0
        %691 = vmatprep.subr.mxu0 0.0
        %692 = vmatpush2.msra.mxu0 0.0
        %693 = vmatprep.subr.mxu0 0.0
        %694 = vmatpush2.msra.mxu0 0.0
        %695 = vmatprep.subr.mxu0 0.0
        %696 = vmatpush2.msra.mxu0 0.0
        %697 = vmatprep.subr.mxu0 0.0
        %698 = vmatpush2.msra.mxu0 0.0
        %699 = vmatprep.subr.mxu0 0.0
        %700 = vmatpush2.msra.mxu0 0.0
        %701 = vmatprep.subr.mxu0 0.0
        %702 = vmatpush2.msra.mxu0 0.0
        %703 = vmatprep.subr.mxu0 0.0
        %704 = vmatpush2.msra.mxu0 0.0
        %705 = vmatprep.subr.mxu0 0.0
        %706 = vmatpush2.msra.mxu0 0.0
        %707 = vmatprep.subr.mxu0 0.0
        %708 = vmatpush2.msra.mxu0 0.0
        %709 = vmatprep.subr.mxu0 0.0
        %710 = vmatpush2.msra.mxu0 0.0
        %711 = vmatprep.subr.mxu0 0.0
        %712 = vmatpush2.msra.mxu0 0.0
        %713 = vmatprep.subr.mxu0 0.0
        %714 = vmatpush2.msra.mxu0 0.0
        %715 = vmatprep.subr.mxu0 0.0
        %716 = vmatpush2.msra.mxu0 0.0
        %717 = vmatprep.mubr.f32.mxu0 0.0
        %718 = vmatmul.mubr.f32.gmra.mxu0 %v651
        %v719 = vpop.f32.mrf.mxu0
        %v720 = vadd.f32 0.0, %v719
        %v721 = vpop.f32.mrf.mxu0
        %722 = vdwg.mxu0
        %v723 = vadd.f32 %v645, %v720
        %724 = vst.msk [vmem:[%s638] sm:$0xff] %vm351, %v723
        %725 = vst.msk [vmem:[%s613] sm:$0xff] %vm450, %v618
        %726 = vrot.lane.b32.xlu0 %v347, 112
        %v727 = vpop.permute.xlu0 %726
        %728 = vrot.lane.b32.xlu0 %v348, 112
        %v729 = vpop.permute.xlu0 %728
        %v730 = vsel %vm351, %v727, 0
        %v732 = vsel %vm351, %v729, 0
        %734 = vmatprep.subr.mxu0 0.0
        %735 = vmatpush1.xpose.msra.mxu0 0.0
        %736 = vmatprep.subr.mxu0 0.0
        %737 = vmatpush1.xpose.msra.mxu0 0.0
        %738 = vmatprep.subr.mxu0 0.0
        %739 = vmatpush1.xpose.msra.mxu0 0.0
        %740 = vmatprep.subr.mxu0 0.0
        %741 = vmatpush1.xpose.msra.mxu0 0.0
        %742 = vmatprep.subr.mxu0 0.0
        %743 = vmatpush1.xpose.msra.mxu0 0.0
        %744 = vmatprep.subr.mxu0 0.0
        %745 = vmatpush1.xpose.msra.mxu0 0.0
        %746 = vmatprep.subr.mxu0 0.0
        %747 = vmatpush1.xpose.msra.mxu0 0.0
        %748 = vmatprep.subr.mxu0 0.0
        %749 = vmatpush1.xpose.msra.mxu0 0.0
        %750 = vmatprep.subr.mxu0 0.0
        %751 = vmatpush1.xpose.msra.mxu0 0.0
        %752 = vmatprep.subr.mxu0 0.0
        %753 = vmatpush1.xpose.msra.mxu0 0.0
        %754 = vmatprep.subr.mxu0 0.0
        %755 = vmatpush1.xpose.msra.mxu0 0.0
        %756 = vmatprep.subr.mxu0 0.0
        %757 = vmatpush1.xpose.msra.mxu0 0.0
        %758 = vmatprep.subr.mxu0 0.0
        %759 = vmatpush1.xpose.msra.mxu0 0.0
        %760 = vmatprep.subr.mxu0 0.0
        %761 = vmatpush1.xpose.msra.mxu0 0.0
        %762 = vmatprep.subr.mxu0 0.0
        %763 = vmatpush1.xpose.msra.mxu0 0.0
        %764 = vmatprep.subr.mxu0 0.0
        %765 = vmatpush1.xpose.msra.mxu0 %v732
        %766 = vmatprep.subr.mxu0 0.0
        %767 = vmatpush2.xpose.msra.mxu0 0.0
        %768 = vmatprep.subr.mxu0 0.0
        %769 = vmatpush2.xpose.msra.mxu0 0.0
        %770 = vmatprep.subr.mxu0 0.0
        %771 = vmatpush2.xpose.msra.mxu0 0.0
        %772 = vmatprep.subr.mxu0 0.0
        %773 = vmatpush2.xpose.msra.mxu0 0.0
        %774 = vmatprep.subr.mxu0 0.0
        %775 = vmatpush2.xpose.msra.mxu0 0.0
        %776 = vmatprep.subr.mxu0 0.0
        %777 = vmatpush2.xpose.msra.mxu0 0.0
        %778 = vmatprep.subr.mxu0 0.0
        %779 = vmatpush2.xpose.msra.mxu0 0.0
        %780 = vmatprep.subr.mxu0 0.0
        %781 = vmatpush2.xpose.msra.mxu0 0.0
        %782 = vmatprep.subr.mxu0 0.0
        %783 = vmatpush2.xpose.msra.mxu0 0.0
        %784 = vmatprep.subr.mxu0 0.0
        %785 = vmatpush2.xpose.msra.mxu0 0.0
        %786 = vmatprep.subr.mxu0 0.0
        %787 = vmatpush2.xpose.msra.mxu0 0.0
        %788 = vmatprep.subr.mxu0 0.0
        %789 = vmatpush2.xpose.msra.mxu0 0.0
        %790 = vmatprep.subr.mxu0 0.0
        %791 = vmatpush2.xpose.msra.mxu0 0.0
        %792 = vmatprep.subr.mxu0 0.0
        %793 = vmatpush2.xpose.msra.mxu0 0.0
        %794 = vmatprep.subr.mxu0 0.0
        %795 = vmatpush2.xpose.msra.mxu0 0.0
        %796 = vmatprep.subr.mxu0 0.0
        %797 = vmatpush2.xpose.msra.mxu0 0.0
        %798 = vmatprep.mubr.f32.mxu0 0.0
        %799 = vmatmul.mubr.f32.gmra.mxu0 %v730
        %v800 = vpop.f32.mrf.mxu0
        %v801 = vadd.f32 %v350, %v800
        %v802 = vpop.f32.mrf.mxu0
        %803 = vdwg.mxu0
        %s804 = scalar_lea.vmem [#allocation2], 16
        %v805 = vld [vmem:[%s804] sm:$0xff]
        %v806 = vsel %vm351, %v801, -inf
        %807 = vmax.xlane.f32.xlu0 %v806
        %v808 = vpop.xlane.xlu0 %807
        %v809 = vmax.f32 %v805, %v808
        %v810 = vsub.f32 %v805, %v809
        %v811 = vmul.f32 %v810, 1.442695
        %v812 = vpow.pop %v811
        %814 = vset.pattern.permute.xlu0 0
        %815 = vperm.xlu0 %814, %v809
        %v816 = vpop.permute.xlu0 %815
        %v818 = vsub.f32 %v801, %v816
        %v819 = vmul.f32 %v818, 1.442695
        %v820 = vpow.pop %v819
        %s821 = scalar_lea.vmem [#allocation3], 16
        %v822 = vld [vmem:[%s821] sm:$0xff]
        %v823 = vmul.f32 %v812, %v822
        %v824 = vsel %vm351, %v820, 0.0
        %825 = vadd.xlane.f32.xlu0 %v824
        %v826 = vpop.xlane.xlu0 %825
        %v827 = vadd.f32 %v823, %v826
        %828 = vst.msk [vmem:[%s821] sm:$0xff] %vm450, %v827
        %s829 = scalar_lea.vmem [#allocation4], 16
        %v830 = vld [vmem:[%s829] sm:$0xff]
        %832 = vset.pattern.permute.xlu0 0
        %833 = vperm.xlu0 %832, %v812
        %v834 = vpop.permute.xlu0 %833
        %v836 = vmul.f32 %v834, %v830
        %837 = vrot.lane.b32.xlu0 %v349, 112
        %v838 = vpop.permute.xlu0 %837
        %v841 = vsel %vm351, %v820, 0
        %843 = vmatprep.subr.mxu0 0.0
        %844 = vmatpush1.msra.mxu0 0.0
        %845 = vmatprep.subr.mxu0 0.0
        %846 = vmatpush1.msra.mxu0 0.0
        %847 = vmatprep.subr.mxu0 0.0
        %848 = vmatpush1.msra.mxu0 0.0
        %849 = vmatprep.subr.mxu0 0.0
        %850 = vmatpush1.msra.mxu0 0.0
        %851 = vmatprep.subr.mxu0 0.0
        %852 = vmatpush1.msra.mxu0 0.0
        %853 = vmatprep.subr.mxu0 0.0
        %854 = vmatpush1.msra.mxu0 0.0
        %855 = vmatprep.subr.mxu0 0.0
        %856 = vmatpush1.msra.mxu0 0.0
        %857 = vmatprep.subr.mxu0 0.0
        %858 = vmatpush1.msra.mxu0 0.0
        %859 = vmatprep.subr.mxu0 0.0
        %860 = vmatpush1.msra.mxu0 0.0
        %861 = vmatprep.subr.mxu0 0.0
        %862 = vmatpush1.msra.mxu0 0.0
        %863 = vmatprep.subr.mxu0 0.0
        %864 = vmatpush1.msra.mxu0 0.0
        %865 = vmatprep.subr.mxu0 0.0
        %866 = vmatpush1.msra.mxu0 0.0
        %867 = vmatprep.subr.mxu0 0.0
        %868 = vmatpush1.msra.mxu0 0.0
        %869 = vmatprep.subr.mxu0 0.0
        %870 = vmatpush1.msra.mxu0 0.0
        %871 = vmatprep.subr.mxu0 0.0
        %872 = vmatpush1.msra.mxu0 0.0
        %873 = vmatprep.subr.mxu0 0.0
        %874 = vmatpush1.msra.mxu0 %v838
        %875 = vmatprep.subr.mxu0 0.0
        %876 = vmatpush2.msra.mxu0 0.0
        %877 = vmatprep.subr.mxu0 0.0
        %878 = vmatpush2.msra.mxu0 0.0
        %879 = vmatprep.subr.mxu0 0.0
        %880 = vmatpush2.msra.mxu0 0.0
        %881 = vmatprep.subr.mxu0 0.0
        %882 = vmatpush2.msra.mxu0 0.0
        %883 = vmatprep.subr.mxu0 0.0
        %884 = vmatpush2.msra.mxu0 0.0
        %885 = vmatprep.subr.mxu0 0.0
        %886 = vmatpush2.msra.mxu0 0.0
        %887 = vmatprep.subr.mxu0 0.0
        %888 = vmatpush2.msra.mxu0 0.0
        %889 = vmatprep.subr.mxu0 0.0
        %890 = vmatpush2.msra.mxu0 0.0
        %891 = vmatprep.subr.mxu0 0.0
        %892 = vmatpush2.msra.mxu0 0.0
        %893 = vmatprep.subr.mxu0 0.0
        %894 = vmatpush2.msra.mxu0 0.0
        %895 = vmatprep.subr.mxu0 0.0
        %896 = vmatpush2.msra.mxu0 0.0
        %897 = vmatprep.subr.mxu0 0.0
        %898 = vmatpush2.msra.mxu0 0.0
        %899 = vmatprep.subr.mxu0 0.0
        %900 = vmatpush2.msra.mxu0 0.0
        %901 = vmatprep.subr.mxu0 0.0
        %902 = vmatpush2.msra.mxu0 0.0
        %903 = vmatprep.subr.mxu0 0.0
        %904 = vmatpush2.msra.mxu0 0.0
        %905 = vmatprep.subr.mxu0 0.0
        %906 = vmatpush2.msra.mxu0 0.0
        %907 = vmatprep.mubr.f32.mxu0 0.0
        %908 = vmatmul.mubr.f32.gmra.mxu0 %v841
        %v909 = vpop.f32.mrf.mxu0
        %v910 = vadd.f32 0.0, %v909
        %v911 = vpop.f32.mrf.mxu0
        %912 = vdwg.mxu0
        %v913 = vadd.f32 %v836, %v910
        %914 = vst.msk [vmem:[%s829] sm:$0xff] %vm351, %v913
        %915 = vst.msk [vmem:[%s804] sm:$0xff] %vm450, %v809
        %916 = vrot.lane.b32.xlu0 %v347, 104
        %v917 = vpop.permute.xlu0 %916
        %918 = vrot.lane.b32.xlu0 %v348, 104
        %v919 = vpop.permute.xlu0 %918
        %v920 = vsel %vm351, %v917, 0
        %v922 = vsel %vm351, %v919, 0
        %924 = vmatprep.subr.mxu0 0.0
        %925 = vmatpush1.xpose.msra.mxu0 0.0
        %926 = vmatprep.subr.mxu0 0.0
        %927 = vmatpush1.xpose.msra.mxu0 0.0
        %928 = vmatprep.subr.mxu0 0.0
        %929 = vmatpush1.xpose.msra.mxu0 0.0
        %930 = vmatprep.subr.mxu0 0.0
        %931 = vmatpush1.xpose.msra.mxu0 0.0
        %932 = vmatprep.subr.mxu0 0.0
        %933 = vmatpush1.xpose.msra.mxu0 0.0
        %934 = vmatprep.subr.mxu0 0.0
        %935 = vmatpush1.xpose.msra.mxu0 0.0
        %936 = vmatprep.subr.mxu0 0.0
        %937 = vmatpush1.xpose.msra.mxu0 0.0
        %938 = vmatprep.subr.mxu0 0.0
        %939 = vmatpush1.xpose.msra.mxu0 0.0
        %940 = vmatprep.subr.mxu0 0.0
        %941 = vmatpush1.xpose.msra.mxu0 0.0
        %942 = vmatprep.subr.mxu0 0.0
        %943 = vmatpush1.xpose.msra.mxu0 0.0
        %944 = vmatprep.subr.mxu0 0.0
        %945 = vmatpush1.xpose.msra.mxu0 0.0
        %946 = vmatprep.subr.mxu0 0.0
        %947 = vmatpush1.xpose.msra.mxu0 0.0
        %948 = vmatprep.subr.mxu0 0.0
        %949 = vmatpush1.xpose.msra.mxu0 0.0
        %950 = vmatprep.subr.mxu0 0.0
        %951 = vmatpush1.xpose.msra.mxu0 0.0
        %952 = vmatprep.subr.mxu0 0.0
        %953 = vmatpush1.xpose.msra.mxu0 0.0
        %954 = vmatprep.subr.mxu0 0.0
        %955 = vmatpush1.xpose.msra.mxu0 %v922
        %956 = vmatprep.subr.mxu0 0.0
        %957 = vmatpush2.xpose.msra.mxu0 0.0
        %958 = vmatprep.subr.mxu0 0.0
        %959 = vmatpush2.xpose.msra.mxu0 0.0
        %960 = vmatprep.subr.mxu0 0.0
        %961 = vmatpush2.xpose.msra.mxu0 0.0
        %962 = vmatprep.subr.mxu0 0.0
        %963 = vmatpush2.xpose.msra.mxu0 0.0
        %964 = vmatprep.subr.mxu0 0.0
        %965 = vmatpush2.xpose.msra.mxu0 0.0
        %966 = vmatprep.subr.mxu0 0.0
        %967 = vmatpush2.xpose.msra.mxu0 0.0
        %968 = vmatprep.subr.mxu0 0.0
        %969 = vmatpush2.xpose.msra.mxu0 0.0
        %970 = vmatprep.subr.mxu0 0.0
        %971 = vmatpush2.xpose.msra.mxu0 0.0
        %972 = vmatprep.subr.mxu0 0.0
        %973 = vmatpush2.xpose.msra.mxu0 0.0
        %974 = vmatprep.subr.mxu0 0.0
        %975 = vmatpush2.xpose.msra.mxu0 0.0
        %976 = vmatprep.subr.mxu0 0.0
        %977 = vmatpush2.xpose.msra.mxu0 0.0
        %978 = vmatprep.subr.mxu0 0.0
        %979 = vmatpush2.xpose.msra.mxu0 0.0
        %980 = vmatprep.subr.mxu0 0.0
        %981 = vmatpush2.xpose.msra.mxu0 0.0
        %982 = vmatprep.subr.mxu0 0.0
        %983 = vmatpush2.xpose.msra.mxu0 0.0
        %984 = vmatprep.subr.mxu0 0.0
        %985 = vmatpush2.xpose.msra.mxu0 0.0
        %986 = vmatprep.subr.mxu0 0.0
        %987 = vmatpush2.xpose.msra.mxu0 0.0
        %988 = vmatprep.mubr.f32.mxu0 0.0
        %989 = vmatmul.mubr.f32.gmra.mxu0 %v920
        %v990 = vpop.f32.mrf.mxu0
        %v991 = vadd.f32 %v350, %v990
        %v992 = vpop.f32.mrf.mxu0
        %993 = vdwg.mxu0
        %s994 = scalar_lea.vmem [#allocation2], 24
        %v995 = vld [vmem:[%s994] sm:$0xff]
        %v996 = vsel %vm351, %v991, -inf
        %997 = vmax.xlane.f32.xlu0 %v996
        %v998 = vpop.xlane.xlu0 %997
        %v999 = vmax.f32 %v995, %v998
        %v1000 = vsub.f32 %v995, %v999
        %v1001 = vmul.f32 %v1000, 1.442695
        %v1002 = vpow.pop %v1001
        %1004 = vset.pattern.permute.xlu0 0
        %1005 = vperm.xlu0 %1004, %v999
        %v1006 = vpop.permute.xlu0 %1005
        %v1008 = vsub.f32 %v991, %v1006
        %v1009 = vmul.f32 %v1008, 1.442695
        %v1010 = vpow.pop %v1009
        %s1011 = scalar_lea.vmem [#allocation3], 24
        %v1012 = vld [vmem:[%s1011] sm:$0xff]
        %v1013 = vmul.f32 %v1002, %v1012
        %v1014 = vsel %vm351, %v1010, 0.0
        %1015 = vadd.xlane.f32.xlu0 %v1014
        %v1016 = vpop.xlane.xlu0 %1015
        %v1017 = vadd.f32 %v1013, %v1016
        %1018 = vst.msk [vmem:[%s1011] sm:$0xff] %vm450, %v1017
        %s1019 = scalar_lea.vmem [#allocation4], 24
        %v1020 = vld [vmem:[%s1019] sm:$0xff]
        %1022 = vset.pattern.permute.xlu0 0
        %1023 = vperm.xlu0 %1022, %v1002
        %v1024 = vpop.permute.xlu0 %1023
        %v1026 = vmul.f32 %v1024, %v1020
        %1027 = vrot.lane.b32.xlu0 %v349, 104
        %v1028 = vpop.permute.xlu0 %1027
        %v1031 = vsel %vm351, %v1010, 0
        %1033 = vmatprep.subr.mxu0 0.0
        %1034 = vmatpush1.msra.mxu0 0.0
        %1035 = vmatprep.subr.mxu0 0.0
        %1036 = vmatpush1.msra.mxu0 0.0
        %1037 = vmatprep.subr.mxu0 0.0
        %1038 = vmatpush1.msra.mxu0 0.0
        %1039 = vmatprep.subr.mxu0 0.0
        %1040 = vmatpush1.msra.mxu0 0.0
        %1041 = vmatprep.subr.mxu0 0.0
        %1042 = vmatpush1.msra.mxu0 0.0
        %1043 = vmatprep.subr.mxu0 0.0
        %1044 = vmatpush1.msra.mxu0 0.0
        %1045 = vmatprep.subr.mxu0 0.0
        %1046 = vmatpush1.msra.mxu0 0.0
        %1047 = vmatprep.subr.mxu0 0.0
        %1048 = vmatpush1.msra.mxu0 0.0
        %1049 = vmatprep.subr.mxu0 0.0
        %1050 = vmatpush1.msra.mxu0 0.0
        %1051 = vmatprep.subr.mxu0 0.0
        %1052 = vmatpush1.msra.mxu0 0.0
        %1053 = vmatprep.subr.mxu0 0.0
        %1054 = vmatpush1.msra.mxu0 0.0
        %1055 = vmatprep.subr.mxu0 0.0
        %1056 = vmatpush1.msra.mxu0 0.0
        %1057 = vmatprep.subr.mxu0 0.0
        %1058 = vmatpush1.msra.mxu0 0.0
        %1059 = vmatprep.subr.mxu0 0.0
        %1060 = vmatpush1.msra.mxu0 0.0
        %1061 = vmatprep.subr.mxu0 0.0
        %1062 = vmatpush1.msra.mxu0 0.0
        %1063 = vmatprep.subr.mxu0 0.0
        %1064 = vmatpush1.msra.mxu0 %v1028
        %1065 = vmatprep.subr.mxu0 0.0
        %1066 = vmatpush2.msra.mxu0 0.0
        %1067 = vmatprep.subr.mxu0 0.0
        %1068 = vmatpush2.msra.mxu0 0.0
        %1069 = vmatprep.subr.mxu0 0.0
        %1070 = vmatpush2.msra.mxu0 0.0
        %1071 = vmatprep.subr.mxu0 0.0
        %1072 = vmatpush2.msra.mxu0 0.0
        %1073 = vmatprep.subr.mxu0 0.0
        %1074 = vmatpush2.msra.mxu0 0.0
        %1075 = vmatprep.subr.mxu0 0.0
        %1076 = vmatpush2.msra.mxu0 0.0
        %1077 = vmatprep.subr.mxu0 0.0
        %1078 = vmatpush2.msra.mxu0 0.0
        %1079 = vmatprep.subr.mxu0 0.0
        %1080 = vmatpush2.msra.mxu0 0.0
        %1081 = vmatprep.subr.mxu0 0.0
        %1082 = vmatpush2.msra.mxu0 0.0
        %1083 = vmatprep.subr.mxu0 0.0
        %1084 = vmatpush2.msra.mxu0 0.0
        %1085 = vmatprep.subr.mxu0 0.0
        %1086 = vmatpush2.msra.mxu0 0.0
        %1087 = vmatprep.subr.mxu0 0.0
        %1088 = vmatpush2.msra.mxu0 0.0
        %1089 = vmatprep.subr.mxu0 0.0
        %1090 = vmatpush2.msra.mxu0 0.0
        %1091 = vmatprep.subr.mxu0 0.0
        %1092 = vmatpush2.msra.mxu0 0.0
        %1093 = vmatprep.subr.mxu0 0.0
        %1094 = vmatpush2.msra.mxu0 0.0
        %1095 = vmatprep.subr.mxu0 0.0
        %1096 = vmatpush2.msra.mxu0 0.0
        %1097 = vmatprep.mubr.f32.mxu0 0.0
        %1098 = vmatmul.mubr.f32.gmra.mxu0 %v1031
        %v1099 = vpop.f32.mrf.mxu0
        %v1100 = vadd.f32 0.0, %v1099
        %v1101 = vpop.f32.mrf.mxu0
        %1102 = vdwg.mxu0
        %v1103 = vadd.f32 %v1026, %v1100
        %1104 = vst.msk [vmem:[%s1019] sm:$0xff] %vm351, %v1103
        %1105 = vst.msk [vmem:[%s994] sm:$0xff] %vm450, %v999
      $region44: #{memory_efficient_attention_forward.4} parent=35 // pred_fallthru
        _
      // Predicated region
      $region45: #{memory_efficient_attention_forward.4} parent=35 // pred_check
        %p1106 = pneg %p317
      $region46: #{memory_efficient_attention_forward.4} parent=35 // pred_check_branch
        %1108 = sbr.rel (%p1106) target = $region48
      $region47: #{memory_efficient_attention_forward.4} parent=35 // pred_region
        %v1109 = vld [vmem:[#allocation3] sm:$0xff]
        %v1110 = vrcp.pop %v1109
        %v1111 = vld [vmem:[#allocation4] sm:$0xff]
        %1113 = vset.pattern.permute.xlu0 0
        %1114 = vperm.xlu0 %1113, %v1110
        %v1115 = vpop.permute.xlu0 %1114
        %v1117 = vmul.f32 %v1111, %v1115
        %s1118 = scalar_lea.vmem [#allocation3], 8
        %v1119 = vld [vmem:[%s1118] sm:$0xff]
        %v1120 = vrcp.pop %v1119
        %s1121 = scalar_lea.vmem [#allocation4], 8
        %v1122 = vld [vmem:[%s1121] sm:$0xff]
        %1124 = vset.pattern.permute.xlu0 0
        %1125 = vperm.xlu0 %1124, %v1120
        %v1126 = vpop.permute.xlu0 %1125
        %v1128 = vmul.f32 %v1122, %v1126
        %s1129 = scalar_lea.vmem [#allocation3], 16
        %v1130 = vld [vmem:[%s1129] sm:$0xff]
        %v1131 = vrcp.pop %v1130
        %s1132 = scalar_lea.vmem [#allocation4], 16
        %v1133 = vld [vmem:[%s1132] sm:$0xff]
        %1135 = vset.pattern.permute.xlu0 0
        %1136 = vperm.xlu0 %1135, %v1131
        %v1137 = vpop.permute.xlu0 %1136
        %v1139 = vmul.f32 %v1133, %v1137
        %s1140 = scalar_lea.vmem [#allocation3], 24
        %v1141 = vld [vmem:[%s1140] sm:$0xff]
        %v1142 = vrcp.pop %v1141
        %s1143 = scalar_lea.vmem [#allocation4], 24
        %v1144 = vld [vmem:[%s1143] sm:$0xff]
        %1146 = vset.pattern.permute.xlu0 0
        %1147 = vperm.xlu0 %1146, %v1142
        %v1148 = vpop.permute.xlu0 %1147
        %v1150 = vmul.f32 %v1144, %v1148
        %1152 = vrot.lane.b32.xlu0 %v1128, 8
        %v1153 = vpop.permute.xlu0 %1152
        %1156 = vrot.lane.b32.xlu0 %v1139, 16
        %v1157 = vpop.permute.xlu0 %1156
        %1160 = vrot.lane.b32.xlu0 %v1150, 24
        %v1161 = vpop.permute.xlu0 %1160
        %vm1163 = vcmask 64512
        %v1164 = vsel %vm1163, %v1117, %v1153
        %vm1165 = vcmask 130048
        %v1166 = vsel %vm1165, %v1164, %v1157
        %vm1167 = vcmask 195584
        %v1168 = vsel %vm1167, %v1166, %v1161
        %vm1169 = vcmp.ne.f32.partialorder %v1168, %v1168
        %v1170 = vsel %vm1169, 0.0, %v1168
        %vm1171 = vcmask 261120
        %1172 = vst.msk [vmem:[%s316] sm:$0xff] %vm1171, %v1170
      $region48: #{memory_efficient_attention_forward.4} parent=35 // pred_fallthru
        _
      %p1173 = scmp.lt.s32.totalorder %s22, 1
      %s1174 = scalar_select %p1173, %s22, 1
      %p1175 = scmp.lt.s32.totalorder %s23, 0
      %s1176 = scalar_select %p1175, %s23, 0
      %s1177 = sadd.s32 %s1176, %s1174
      %s1178 = smul.addr %s1177, 8
      %s1179 = scalar_lea.vmem %s5, %s1178
      // Predicated region
      $region49: #{memory_efficient_attention_forward.4} parent=35 // pred_check
        %p1180 = pneg %p168
      $region50: #{memory_efficient_attention_forward.4} parent=35 // pred_check_branch
        %1182 = sbr.rel (%p1180) target = $region52
      $region51: #{memory_efficient_attention_forward.4} parent=35 // pred_region
        _
      $region52: #{memory_efficient_attention_forward.4} parent=35 // pred_fallthru
        _
    $region36: #{memory_efficient_attention_forward.4} parent=5 // pred_fallthru
      _
    %p1183 = scmp.le.s32.totalorder 2, %s12
    // Predicated region
    $region53: #{memory_efficient_attention_forward.4} parent=5 // pred_check
      %p1184 = pneg %p1183
    $region54: #{memory_efficient_attention_forward.4} parent=5 // pred_check_branch
      %1186 = sbr.rel (%p1184) target = $region56
    $region55: #{memory_efficient_attention_forward.4} parent=5 // pred_region
      %s1187 = ssub.s32 %s12, 2
      // Predicated region
      $region57: #{memory_efficient_attention_forward.4} parent=55 // pred_check
        %p1188 = pneg %p174
      $region58: #{memory_efficient_attention_forward.4} parent=55 // pred_check_branch
        %1190 = sbr.rel (%p1188) target = $region60
      $region59: #{memory_efficient_attention_forward.4} parent=55 // pred_region
        %p1191 = scmp.lt.s32.totalorder %s25, 1
        %s1192 = scalar_select %p1191, %s25, 1
        %p1193 = scmp.lt.s32.totalorder %s26, 0
        %s1194 = scalar_select %p1193, %s26, 0
        %s1195 = sadd.s32 %s1194, %s1192
        %s1196 = smul.addr %s1195, 8
        %s1197 = scalar_lea.vmem %s5, %s1196
      $region60: #{memory_efficient_attention_forward.4} parent=55 // pred_fallthru
        _
    $region56: #{memory_efficient_attention_forward.4} parent=5 // pred_fallthru
      _
  $region6: #{memory_efficient_attention_forward.4} parent=0 // loop_footer
    %s16 = sadd.s32 1, %s12
  $region7: #{memory_efficient_attention_forward.4} parent=0 // loop_footer_branch
    %11 = sbr.rel target = $region3
  $region8: #{memory_efficient_attention_forward.4} parent=0 // loop_exit
    _

</llo_original>
